<compile_context>
chip_gen: v6e
topology: v6e:2x2x1
jax: 0.10.0
libtpu: 0.0.40
codegen_flags: <defaults>
</compile_context>

<pallas_src>
import functools

import jax
import jax.numpy as jnp
from jax.experimental import pallas as pl
from jax.experimental.pallas import tpu as pltpu

EPS = 1e-5


def _round_up(x, m):
    return (x + m - 1) // m * m


def _layernorm(x, gamma, beta, n_real, h_pad):
    """LayerNorm over the last dim of a lane-padded f32 tile.

    Padded lanes of `x` are exactly 0 and gamma/beta are 0 there.  Instead of
    masking, use the exact correction: padded lanes have diff == -mu, so
    sum(diff^2) over the real lanes = sum(diff^2) - (h_pad - n_real) * mu^2.
    Matches torch.nn.LayerNorm on the real features and leaves padded lanes 0.
    """
    inv_n = 1.0 / float(n_real)
    mu = jnp.sum(x, axis=-1, keepdims=True) * inv_n
    diff = x - mu
    sq = jnp.sum(diff * diff, axis=-1, keepdims=True)
    if n_real != h_pad:
        sq = sq - float(h_pad - n_real) * (mu * mu)
    var = sq * inv_n
    return diff * jax.lax.rsqrt(var + EPS) * gamma + beta


def critic_kernel(state_ref, action_ref,
                  w1_ref, b1_ref, g1_ref, be1_ref,
                  w2_ref, b2_ref, g2_ref, be2_ref,
                  wa_ref, ba_ref,
                  wq_ref, bq_ref,
                  q_ref, *, h1, h2, h1p, h2p, compute_dtype):
    cd = compute_dtype

    # fc1 -> LayerNorm1 -> relu            (state tile: (TILE_B, in_dim))
    x = jnp.dot(state_ref[...].astype(cd), w1_ref[...],
                preferred_element_type=jnp.float32) + b1_ref[...]
    x = _layernorm(x, g1_ref[...], be1_ref[...], h1, h1p)
    x = jnp.maximum(x, 0.0)

    # fc2 -> LayerNorm2
    x = jnp.dot(x.astype(cd), w2_ref[...],
                preferred_element_type=jnp.float32) + b2_ref[...]
    x = _layernorm(x, g2_ref[...], be2_ref[...], h2, h2p)

    # action branch (added directly, then ReLU -- matches the given forward())
    av = jnp.dot(action_ref[...].astype(cd), wa_ref[...],
                 preferred_element_type=jnp.float32) + ba_ref[...]
    sav = jnp.maximum(x + av, 0.0)

    # q head: NN-form matmul against the (h2p, 1) weight column -> (TILE_B, 1).
    # No operand transposes, no full-tile XLU transpose of sav; the N=1 MXU
    # matmul is filler on the non-binding unit.  Padded rows of wq are 0.
    q_col = jnp.dot(sav.astype(cd), wq_ref[...],
                    preferred_element_type=jnp.float32)          # (TILE_B, 1)
    q_ref[...] = (q_col + bq_ref[...]).astype(q_ref.dtype)


def prepare_params(params, *, compute_dtype=jnp.bfloat16):
    """Pad / transpose / cast all parameters ONCE (cache across forward calls).

    Weights are stored [in, out]; biases / LN params as [1, features].
    Padded entries are exactly 0 (load-bearing for the LN statistics).
    Returns (tensors_tuple, meta_dict).
    """
    in_dim, h1 = params["w1"].shape
    n_actions = params["wa"].shape[0]
    h2 = params["w2"].shape[1]
    h1p = _round_up(h1, 128)
    h2p = _round_up(h2, 128)
    cd = compute_dtype

    def pad2(x, rows, cols, dtype):
        return jnp.pad(x, ((0, rows - x.shape[0]),
                           (0, cols - x.shape[1]))).astype(dtype)

    tensors = (
        pad2(params["w1"], in_dim, h1p, cd),
        pad2(params["b1"], 1, h1p, jnp.float32),
        pad2(params["g1"], 1, h1p, jnp.float32),
        pad2(params["be1"], 1, h1p, jnp.float32),
        pad2(params["w2"], h1p, h2p, cd),
        pad2(params["b2"], 1, h2p, jnp.float32),
        pad2(params["g2"], 1, h2p, jnp.float32),
        pad2(params["be2"], 1, h2p, jnp.float32),
        pad2(params["wa"], n_actions, h2p, cd),
        pad2(params["ba"], 1, h2p, jnp.float32),
        pad2(params["wq"], h2p, 1, cd),            # (h2p, 1) column for the head
        params["bq"].reshape(1, 1).astype(jnp.float32),
    )
    meta = dict(in_dim=in_dim, n_actions=n_actions, h1=h1, h2=h2,
                h1p=h1p, h2p=h2p, compute_dtype=cd)
    return tensors, meta


def critic_forward(state, action, prepared, *, tile_b=None,
                   vmem_limit_bytes=None, single_buffer_params=False):
    tensors, meta = prepared
    B, in_dim = state.shape
    n_actions = action.shape[1]
    assert in_dim == meta["in_dim"] and n_actions == meta["n_actions"]

    if tile_b is None:
        # 128-aligned (lane-dense / sublane-pack aligned); aim for >=2 grid
        # steps so v7x's two TensorCores both get work; cap at 512 rows.
        # For very large B on v5e/v6e, pass tile_b=1024 (+ vmem_limit_bytes).
        tile_b = min(512, _round_up(max((B + 1) // 2, 1), 128))
    bp = _round_up(B, tile_b)
    num_tiles = bp // tile_b

    # Keep inputs in their HBM dtype; only pad the batch axis if needed.
    s = state if bp == B else jnp.pad(state, ((0, bp - B), (0, 0)))
    a = action if bp == B else jnp.pad(action, ((0, bp - B), (0, 0)))

    def param_spec(shape):
        if single_buffer_params:
            # v7x (64 MiB VMEM): constant-index params need only one buffer.
            return pl.BlockSpec(shape, lambda i: (0, 0),
                                pipeline_mode=pl.Buffered(1))
        return pl.BlockSpec(shape, lambda i: (0, 0))

    in_specs = (
        [pl.BlockSpec((tile_b, in_dim), lambda i: (i, 0)),      # state: batch-tiled
         pl.BlockSpec((tile_b, n_actions), lambda i: (i, 0))]   # action: batch-tiled
        + [param_spec(p.shape) for p in tensors]                # VMEM-resident params
    )
    out_specs = pl.BlockSpec((tile_b, 1), lambda i: (i, 0))

    cp_kwargs = dict(dimension_semantics=("parallel",))
    if vmem_limit_bytes is not None:
        cp_kwargs["vmem_limit_bytes"] = vmem_limit_bytes

    kernel = functools.partial(
        critic_kernel, h1=meta["h1"], h2=meta["h2"],
        h1p=meta["h1p"], h2p=meta["h2p"], compute_dtype=meta["compute_dtype"])

    q = pl.pallas_call(
        kernel,
        grid=(num_tiles,),
        in_specs=in_specs,
        out_specs=out_specs,
        out_shape=jax.ShapeDtypeStruct((bp, 1), jnp.float32),
        compiler_params=pltpu.CompilerParams(**cp_kwargs),
    )(s, a, *tensors)

    return q[:B]


def init_params(key, in_dim, n_actions, h1, h2):
    """Deterministic init mirroring the PyTorch __init__ uniform bounds."""
    ks = jax.random.split(key, 8)
    f1 = 1.0 / jnp.sqrt(h1)
    f2 = 1.0 / jnp.sqrt(h2)
    f3 = 0.003
    f4 = 1.0 / jnp.sqrt(h2)

    def u(k, shape, b):
        return jax.random.uniform(k, shape, jnp.float32, -b, b)

    return dict(
        w1=u(ks[0], (in_dim, h1), f1), b1=u(ks[1], (1, h1), f1),
        g1=jnp.ones((1, h1), jnp.float32), be1=jnp.zeros((1, h1), jnp.float32),
        w2=u(ks[2], (h1, h2), f2), b2=u(ks[3], (1, h2), f2),
        g2=jnp.ones((1, h2), jnp.float32), be2=jnp.zeros((1, h2), jnp.float32),
        wa=u(ks[4], (n_actions, h2), f4), ba=u(ks[5], (1, h2), f4),
        wq=u(ks[6], (h2, 1), f3), bq=u(ks[7], (1, 1), f3),
    )


def reference_forward(state, action, p, compute_dtype=jnp.bfloat16):
    """Pure-JAX reference.  With compute_dtype=float32 this is the exact
    PyTorch forward(); with bfloat16 it mirrors the kernel's mixed precision
    (matmul operands rounded to compute_dtype, f32 accumulation, f32 LN)."""
    def mm(x, w):
        return jnp.dot(x.astype(compute_dtype).astype(jnp.float32),
                       w.astype(compute_dtype).astype(jnp.float32))

    def ln(x, g, b):
        mu = jnp.mean(x, axis=-1, keepdims=True)
        var = jnp.mean((x - mu) ** 2, axis=-1, keepdims=True)
        return (x - mu) * jax.lax.rsqrt(var + EPS) * g + b

    x = mm(state, p["w1"]) + p["b1"]
    x = jnp.maximum(ln(x, p["g1"], p["be1"]), 0.0)
    x = mm(x, p["w2"]) + p["b2"]
    x = ln(x, p["g2"], p["be2"])
    av = mm(action, p["wa"]) + p["ba"]
    sav = jnp.maximum(x + av, 0.0)
    return mm(sav, p["wq"]) + p["bq"]


if __name__ == "__main__":
    B, IN_DIM, N_ACTIONS, H1, H2 = 8, 16, 8, 64, 32

    key = jax.random.PRNGKey(0)
    k_state, k_action, k_params = jax.random.split(key, 3)
    state = jax.random.normal(k_state, (B, IN_DIM), jnp.float32)
    action = jax.random.normal(k_action, (B, N_ACTIONS), jnp.float32)
    params = init_params(k_params, IN_DIM, N_ACTIONS, H1, H2)

    # Default (bf16 matmul operands, f32 accumulation / LayerNorm) path.
    prepared_bf16 = prepare_params(params, compute_dtype=jnp.bfloat16)
    q_bf16 = jax.block_until_ready(critic_forward(state, action, prepared_bf16))
    q_ref_bf16 = reference_forward(state, action, params,
                                   compute_dtype=jnp.bfloat16)
    assert q_bf16.shape == (B, 1), q_bf16.shape
    assert jnp.allclose(q_bf16, q_ref_bf16, atol=1e-3, rtol=1e-3), (
        "bf16-path mismatch vs reference, max abs err = "
        f"{float(jnp.max(jnp.abs(q_bf16 - q_ref_bf16)))}")

    # Full-f32 path: parity with the exact PyTorch forward semantics.
    prepared_f32 = prepare_params(params, compute_dtype=jnp.float32)
    q_f32 = jax.block_until_ready(critic_forward(state, action, prepared_f32))
    q_ref_f32 = reference_forward(state, action, params,
                                  compute_dtype=jnp.float32)
    assert jnp.allclose(q_f32, q_ref_f32, atol=2e-4, rtol=2e-4), (
        "f32-path mismatch vs reference, max abs err = "
        f"{float(jnp.max(jnp.abs(q_f32 - q_ref_f32)))}")

    print("KERNEL_OK")
</pallas_src>

<mosaic_0001>
module attributes {stable_mosaic.version = 11 : i64} {
  func.func @critic_kernel(%arg0: i32, %arg1: memref<128x16xf32, #tpu.memory_space<vmem>>, %arg2: memref<128x8xf32, #tpu.memory_space<vmem>>, %arg3: memref<16x128xbf16, #tpu.memory_space<vmem>>, %arg4: memref<1x128xf32, #tpu.memory_space<vmem>>, %arg5: memref<1x128xf32, #tpu.memory_space<vmem>>, %arg6: memref<1x128xf32, #tpu.memory_space<vmem>>, %arg7: memref<128x128xbf16, #tpu.memory_space<vmem>>, %arg8: memref<1x128xf32, #tpu.memory_space<vmem>>, %arg9: memref<1x128xf32, #tpu.memory_space<vmem>>, %arg10: memref<1x128xf32, #tpu.memory_space<vmem>>, %arg11: memref<8x128xbf16, #tpu.memory_space<vmem>>, %arg12: memref<1x128xf32, #tpu.memory_space<vmem>>, %arg13: memref<128x1xbf16, #tpu.memory_space<vmem>>, %arg14: memref<1x1xf32, #tpu.memory_space<vmem>>, %arg15: memref<128x1xf32, #tpu.memory_space<vmem>>) attributes {dimension_semantics = [#tpu.dimension_semantics<parallel>], iteration_bounds = array<i64: 1>, scalar_prefetch = 0 : i64, scratch_operands = 0 : i64, tpu.core_type = #tpu.core_type<tc>, window_params = [{transform_indices = @transform_0, window_bounds = array<i64: 128, 16>}, {transform_indices = @transform_1, window_bounds = array<i64: 128, 8>}, {pipeline_mode = #tpu.pipeline_mode<synchronous>, transform_indices = @transform_2, window_bounds = array<i64: 16, 128>}, {pipeline_mode = #tpu.pipeline_mode<synchronous>, transform_indices = @transform_3, window_bounds = array<i64: 1, 128>}, {pipeline_mode = #tpu.pipeline_mode<synchronous>, transform_indices = @transform_4, window_bounds = array<i64: 1, 128>}, {pipeline_mode = #tpu.pipeline_mode<synchronous>, transform_indices = @transform_5, window_bounds = array<i64: 1, 128>}, {pipeline_mode = #tpu.pipeline_mode<synchronous>, transform_indices = @transform_6, window_bounds = array<i64: 128, 128>}, {pipeline_mode = #tpu.pipeline_mode<synchronous>, transform_indices = @transform_7, window_bounds = array<i64: 1, 128>}, {pipeline_mode = #tpu.pipeline_mode<synchronous>, transform_indices = @transform_8, window_bounds = array<i64: 1, 128>}, {pipeline_mode = #tpu.pipeline_mode<synchronous>, transform_indices = @transform_9, window_bounds = array<i64: 1, 128>}, {pipeline_mode = #tpu.pipeline_mode<synchronous>, transform_indices = @transform_10, window_bounds = array<i64: 8, 128>}, {pipeline_mode = #tpu.pipeline_mode<synchronous>, transform_indices = @transform_11, window_bounds = array<i64: 1, 128>}, {pipeline_mode = #tpu.pipeline_mode<synchronous>, transform_indices = @transform_12, window_bounds = array<i64: 128, 1>}, {pipeline_mode = #tpu.pipeline_mode<synchronous>, transform_indices = @transform_13, window_bounds = array<i64: 1, 1>}, {transform_indices = @transform_14, window_bounds = array<i64: 128, 1>}]} {
    %c0 = arith.constant 0 : index
    %c0_0 = arith.constant 0 : index
    %0 = vector.load %arg1[%c0, %c0_0] : memref<128x16xf32, #tpu.memory_space<vmem>>, vector<128x16xf32>
    %1 = arith.truncf %0 : vector<128x16xf32> to vector<128x16xbf16>
    %c0_1 = arith.constant 0 : index
    %c0_2 = arith.constant 0 : index
    %2 = vector.load %arg3[%c0_1, %c0_2] : memref<16x128xbf16, #tpu.memory_space<vmem>>, vector<16x128xbf16>
    %cst = arith.constant dense<0.000000e+00> : vector<128x128xf32>
    %3 = tpu.matmul %1, %2, %cst {dimension_numbers = #tpu.dot_dimension_numbers<[1], [0], [0], [1], [0, 0, 1, 1], [], []>} : vector<128x16xbf16>, vector<16x128xbf16>, vector<128x128xf32> -> vector<128x128xf32>
    %c0_3 = arith.constant 0 : index
    %c0_4 = arith.constant 0 : index
    %4 = vector.load %arg4[%c0_3, %c0_4] : memref<1x128xf32, #tpu.memory_space<vmem>>, vector<1x128xf32>
    %5 = vector.broadcast %4 : vector<1x128xf32> to vector<128x128xf32>
    %6 = arith.addf %3, %5 : vector<128x128xf32>
    %c0_5 = arith.constant 0 : index
    %c0_6 = arith.constant 0 : index
    %7 = vector.load %arg5[%c0_5, %c0_6] : memref<1x128xf32, #tpu.memory_space<vmem>>, vector<1x128xf32>
    %c0_7 = arith.constant 0 : index
    %c0_8 = arith.constant 0 : index
    %8 = vector.load %arg6[%c0_7, %c0_8] : memref<1x128xf32, #tpu.memory_space<vmem>>, vector<1x128xf32>
    %cst_9 = arith.constant dense<0.000000e+00> : vector<128xf32>
    %9 = vector.multi_reduction <add>, %6, %cst_9 [1] : vector<128x128xf32> to vector<128xf32>
    %10 = vector.shape_cast %9 : vector<128xf32> to vector<128x1xf32>
    %cst_10 = arith.constant 1.562500e-02 : f32
    %11 = vector.broadcast %cst_10 : f32 to vector<128x1xf32>
    %12 = arith.mulf %10, %11 : vector<128x1xf32>
    %13 = vector.broadcast %12 : vector<128x1xf32> to vector<128x128xf32>
    %14 = arith.subf %6, %13 : vector<128x128xf32>
    %15 = arith.mulf %14, %14 : vector<128x128xf32>
    %cst_11 = arith.constant dense<0.000000e+00> : vector<128xf32>
    %16 = vector.multi_reduction <add>, %15, %cst_11 [1] : vector<128x128xf32> to vector<128xf32>
    %17 = vector.shape_cast %16 : vector<128xf32> to vector<128x1xf32>
    %18 = arith.mulf %12, %12 : vector<128x1xf32>
    %cst_12 = arith.constant 6.400000e+01 : f32
    %19 = vector.broadcast %cst_12 : f32 to vector<128x1xf32>
    %20 = arith.mulf %19, %18 : vector<128x1xf32>
    %21 = arith.subf %17, %20 : vector<128x1xf32>
    %cst_13 = arith.constant 1.562500e-02 : f32
    %22 = vector.broadcast %cst_13 : f32 to vector<128x1xf32>
    %23 = arith.mulf %21, %22 : vector<128x1xf32>
    %cst_14 = arith.constant 9.99999974E-6 : f32
    %24 = vector.broadcast %cst_14 : f32 to vector<128x1xf32>
    %25 = arith.addf %23, %24 : vector<128x1xf32>
    %26 = math.rsqrt %25 : vector<128x1xf32>
    %27 = vector.broadcast %26 : vector<128x1xf32> to vector<128x128xf32>
    %28 = arith.mulf %14, %27 : vector<128x128xf32>
    %29 = vector.broadcast %7 : vector<1x128xf32> to vector<128x128xf32>
    %30 = arith.mulf %28, %29 : vector<128x128xf32>
    %31 = vector.broadcast %8 : vector<1x128xf32> to vector<128x128xf32>
    %32 = arith.addf %30, %31 : vector<128x128xf32>
    %cst_15 = arith.constant 0.000000e+00 : f32
    %33 = vector.broadcast %cst_15 : f32 to vector<128x128xf32>
    %34 = arith.maximumf %32, %33 : vector<128x128xf32>
    %35 = arith.truncf %34 : vector<128x128xf32> to vector<128x128xbf16>
    %c0_16 = arith.constant 0 : index
    %c0_17 = arith.constant 0 : index
    %36 = vector.load %arg7[%c0_16, %c0_17] : memref<128x128xbf16, #tpu.memory_space<vmem>>, vector<128x128xbf16>
    %cst_18 = arith.constant dense<0.000000e+00> : vector<128x128xf32>
    %37 = tpu.matmul %35, %36, %cst_18 {dimension_numbers = #tpu.dot_dimension_numbers<[1], [0], [0], [1], [0, 0, 1, 1], [], []>} : vector<128x128xbf16>, vector<128x128xbf16>, vector<128x128xf32> -> vector<128x128xf32>
    %c0_19 = arith.constant 0 : index
    %c0_20 = arith.constant 0 : index
    %38 = vector.load %arg8[%c0_19, %c0_20] : memref<1x128xf32, #tpu.memory_space<vmem>>, vector<1x128xf32>
    %39 = vector.broadcast %38 : vector<1x128xf32> to vector<128x128xf32>
    %40 = arith.addf %37, %39 : vector<128x128xf32>
    %c0_21 = arith.constant 0 : index
    %c0_22 = arith.constant 0 : index
    %41 = vector.load %arg9[%c0_21, %c0_22] : memref<1x128xf32, #tpu.memory_space<vmem>>, vector<1x128xf32>
    %c0_23 = arith.constant 0 : index
    %c0_24 = arith.constant 0 : index
    %42 = vector.load %arg10[%c0_23, %c0_24] : memref<1x128xf32, #tpu.memory_space<vmem>>, vector<1x128xf32>
    %cst_25 = arith.constant dense<0.000000e+00> : vector<128xf32>
    %43 = vector.multi_reduction <add>, %40, %cst_25 [1] : vector<128x128xf32> to vector<128xf32>
    %44 = vector.shape_cast %43 : vector<128xf32> to vector<128x1xf32>
    %cst_26 = arith.constant 3.125000e-02 : f32
    %45 = vector.broadcast %cst_26 : f32 to vector<128x1xf32>
    %46 = arith.mulf %44, %45 : vector<128x1xf32>
    %47 = vector.broadcast %46 : vector<128x1xf32> to vector<128x128xf32>
    %48 = arith.subf %40, %47 : vector<128x128xf32>
    %49 = arith.mulf %48, %48 : vector<128x128xf32>
    %cst_27 = arith.constant dense<0.000000e+00> : vector<128xf32>
    %50 = vector.multi_reduction <add>, %49, %cst_27 [1] : vector<128x128xf32> to vector<128xf32>
    %51 = vector.shape_cast %50 : vector<128xf32> to vector<128x1xf32>
    %52 = arith.mulf %46, %46 : vector<128x1xf32>
    %cst_28 = arith.constant 9.600000e+01 : f32
    %53 = vector.broadcast %cst_28 : f32 to vector<128x1xf32>
    %54 = arith.mulf %53, %52 : vector<128x1xf32>
    %55 = arith.subf %51, %54 : vector<128x1xf32>
    %cst_29 = arith.constant 3.125000e-02 : f32
    %56 = vector.broadcast %cst_29 : f32 to vector<128x1xf32>
    %57 = arith.mulf %55, %56 : vector<128x1xf32>
    %cst_30 = arith.constant 9.99999974E-6 : f32
    %58 = vector.broadcast %cst_30 : f32 to vector<128x1xf32>
    %59 = arith.addf %57, %58 : vector<128x1xf32>
    %60 = math.rsqrt %59 : vector<128x1xf32>
    %61 = vector.broadcast %60 : vector<128x1xf32> to vector<128x128xf32>
    %62 = arith.mulf %48, %61 : vector<128x128xf32>
    %63 = vector.broadcast %41 : vector<1x128xf32> to vector<128x128xf32>
    %64 = arith.mulf %62, %63 : vector<128x128xf32>
    %65 = vector.broadcast %42 : vector<1x128xf32> to vector<128x128xf32>
    %66 = arith.addf %64, %65 : vector<128x128xf32>
    %c0_31 = arith.constant 0 : index
    %c0_32 = arith.constant 0 : index
    %67 = vector.load %arg2[%c0_31, %c0_32] : memref<128x8xf32, #tpu.memory_space<vmem>>, vector<128x8xf32>
    %68 = arith.truncf %67 : vector<128x8xf32> to vector<128x8xbf16>
    %c0_33 = arith.constant 0 : index
    %c0_34 = arith.constant 0 : index
    %69 = vector.load %arg11[%c0_33, %c0_34] : memref<8x128xbf16, #tpu.memory_space<vmem>>, vector<8x128xbf16>
    %cst_35 = arith.constant dense<0.000000e+00> : vector<128x128xf32>
    %70 = tpu.matmul %68, %69, %cst_35 {dimension_numbers = #tpu.dot_dimension_numbers<[1], [0], [0], [1], [0, 0, 1, 1], [], []>} : vector<128x8xbf16>, vector<8x128xbf16>, vector<128x128xf32> -> vector<128x128xf32>
    %c0_36 = arith.constant 0 : index
    %c0_37 = arith.constant 0 : index
    %71 = vector.load %arg12[%c0_36, %c0_37] : memref<1x128xf32, #tpu.memory_space<vmem>>, vector<1x128xf32>
    %72 = vector.broadcast %71 : vector<1x128xf32> to vector<128x128xf32>
    %73 = arith.addf %70, %72 : vector<128x128xf32>
    %74 = arith.addf %66, %73 : vector<128x128xf32>
    %cst_38 = arith.constant 0.000000e+00 : f32
    %75 = vector.broadcast %cst_38 : f32 to vector<128x128xf32>
    %76 = arith.maximumf %74, %75 : vector<128x128xf32>
    %77 = arith.truncf %76 : vector<128x128xf32> to vector<128x128xbf16>
    %c0_39 = arith.constant 0 : index
    %c0_40 = arith.constant 0 : index
    %78 = vector.load %arg13[%c0_39, %c0_40] : memref<128x1xbf16, #tpu.memory_space<vmem>>, vector<128x1xbf16>
    %cst_41 = arith.constant dense<0.000000e+00> : vector<128x1xf32>
    %79 = tpu.matmul %77, %78, %cst_41 {dimension_numbers = #tpu.dot_dimension_numbers<[1], [0], [0], [1], [0, 0, 1, 1], [], []>} : vector<128x128xbf16>, vector<128x1xbf16>, vector<128x1xf32> -> vector<128x1xf32>
    %c0_42 = arith.constant 0 : index
    %c0_43 = arith.constant 0 : index
    %80 = vector.load %arg14[%c0_42, %c0_43] : memref<1x1xf32, #tpu.memory_space<vmem>>, vector<1x1xf32>
    %81 = vector.broadcast %80 : vector<1x1xf32> to vector<128x1xf32>
    %82 = arith.addf %79, %81 : vector<128x1xf32>
    %c0_44 = arith.constant 0 : index
    %c0_45 = arith.constant 0 : index
    %83 = vector.load %arg15[%c0_44, %c0_45] : memref<128x1xf32, #tpu.memory_space<vmem>>, vector<128x1xf32>
    tpu.vector_store %arg15[%c0_44, %c0_45], %82 {strides = array<i32>} : memref<128x1xf32, #tpu.memory_space<vmem>>, vector<128x1xf32>,
    return
  }
  func.func @transform_0(%arg0: i32) -> (i32, i32) {
    %c0_i32 = arith.constant 0 : i32
    %c0_i32_0 = arith.constant 0 : i32
    return %arg0, %c0_i32 : i32, i32
  }
  func.func @transform_1(%arg0: i32) -> (i32, i32) {
    %c0_i32 = arith.constant 0 : i32
    %c0_i32_0 = arith.constant 0 : i32
    return %arg0, %c0_i32 : i32, i32
  }
  func.func @transform_2(%arg0: i32) -> (i32, i32) {
    %c0_i32 = arith.constant 0 : i32
    %c0_i32_0 = arith.constant 0 : i32
    %c0_i32_1 = arith.constant 0 : i32
    return %c0_i32, %c0_i32_0 : i32, i32
  }
  func.func @transform_3(%arg0: i32) -> (i32, i32) {
    %c0_i32 = arith.constant 0 : i32
    %c0_i32_0 = arith.constant 0 : i32
    %c0_i32_1 = arith.constant 0 : i32
    return %c0_i32, %c0_i32_0 : i32, i32
  }
  func.func @transform_4(%arg0: i32) -> (i32, i32) {
    %c0_i32 = arith.constant 0 : i32
    %c0_i32_0 = arith.constant 0 : i32
    %c0_i32_1 = arith.constant 0 : i32
    return %c0_i32, %c0_i32_0 : i32, i32
  }
  func.func @transform_5(%arg0: i32) -> (i32, i32) {
    %c0_i32 = arith.constant 0 : i32
    %c0_i32_0 = arith.constant 0 : i32
    %c0_i32_1 = arith.constant 0 : i32
    return %c0_i32, %c0_i32_0 : i32, i32
  }
  func.func @transform_6(%arg0: i32) -> (i32, i32) {
    %c0_i32 = arith.constant 0 : i32
    %c0_i32_0 = arith.constant 0 : i32
    %c0_i32_1 = arith.constant 0 : i32
    return %c0_i32, %c0_i32_0 : i32, i32
  }
  func.func @transform_7(%arg0: i32) -> (i32, i32) {
    %c0_i32 = arith.constant 0 : i32
    %c0_i32_0 = arith.constant 0 : i32
    %c0_i32_1 = arith.constant 0 : i32
    return %c0_i32, %c0_i32_0 : i32, i32
  }
  func.func @transform_8(%arg0: i32) -> (i32, i32) {
    %c0_i32 = arith.constant 0 : i32
    %c0_i32_0 = arith.constant 0 : i32
    %c0_i32_1 = arith.constant 0 : i32
    return %c0_i32, %c0_i32_0 : i32, i32
  }
  func.func @transform_9(%arg0: i32) -> (i32, i32) {
    %c0_i32 = arith.constant 0 : i32
    %c0_i32_0 = arith.constant 0 : i32
    %c0_i32_1 = arith.constant 0 : i32
    return %c0_i32, %c0_i32_0 : i32, i32
  }
  func.func @transform_10(%arg0: i32) -> (i32, i32) {
    %c0_i32 = arith.constant 0 : i32
    %c0_i32_0 = arith.constant 0 : i32
    %c0_i32_1 = arith.constant 0 : i32
    return %c0_i32, %c0_i32_0 : i32, i32
  }
  func.func @transform_11(%arg0: i32) -> (i32, i32) {
    %c0_i32 = arith.constant 0 : i32
    %c0_i32_0 = arith.constant 0 : i32
    %c0_i32_1 = arith.constant 0 : i32
    return %c0_i32, %c0_i32_0 : i32, i32
  }
  func.func @transform_12(%arg0: i32) -> (i32, i32) {
    %c0_i32 = arith.constant 0 : i32
    %c0_i32_0 = arith.constant 0 : i32
    %c0_i32_1 = arith.constant 0 : i32
    return %c0_i32, %c0_i32_0 : i32, i32
  }
  func.func @transform_13(%arg0: i32) -> (i32, i32) {
    %c0_i32 = arith.constant 0 : i32
    %c0_i32_0 = arith.constant 0 : i32
    %c0_i32_1 = arith.constant 0 : i32
    return %c0_i32, %c0_i32_0 : i32, i32
  }
  func.func @transform_14(%arg0: i32) -> (i32, i32) {
    %c0_i32 = arith.constant 0 : i32
    %c0_i32_0 = arith.constant 0 : i32
    return %arg0, %c0_i32 : i32, i32
  }
}

</mosaic_0001>

<llo_original>
// kernel: tpu_custom_call.1
$region0: #{tpu_custom_call.1}
  #allocation0 [shape = 'u32[]', space=smem, size = 0x4, offset = 0x4, fixed_abs, tag = 'smem constant byte address 0x4 - core index']
  #allocation1 [shape = 'u32[144,128]{1,0:T(1,128)}', space=vmem, size = 0x12000, scoped, tag = 'internal scratch']
  #allocation2 [shape = 'f32[1,1]{1,0:T(1,128)S(1)}', space=vmem, size = 0x200, scoped, tag = 'scoped memory for tpu_custom_call.1']
  %s0 = inlined_call_operand.vmem [shape: f32[128,16], index: 0, kind: input, shape index: {}]
  %s1 = inlined_call_operand.vmem [shape: f32[128,8], index: 1, kind: input, shape index: {}]
  %s2 = inlined_call_operand.vmem [shape: bf16[16,128], index: 2, kind: input, shape index: {}]
  %s3 = inlined_call_operand.vmem [shape: f32[1,128], index: 3, kind: input, shape index: {}]
  %s4 = inlined_call_operand.vmem [shape: f32[1,128], index: 4, kind: input, shape index: {}]
  %s5 = inlined_call_operand.vmem [shape: f32[1,128], index: 5, kind: input, shape index: {}]
  %s6 = inlined_call_operand.vmem [shape: bf16[128,128], index: 6, kind: input, shape index: {}]
  %s7 = inlined_call_operand.vmem [shape: f32[1,128], index: 7, kind: input, shape index: {}]
  %s8 = inlined_call_operand.vmem [shape: f32[1,128], index: 8, kind: input, shape index: {}]
  %s9 = inlined_call_operand.vmem [shape: f32[1,128], index: 9, kind: input, shape index: {}]
  %s10 = inlined_call_operand.vmem [shape: bf16[8,128], index: 10, kind: input, shape index: {}]
  %s11 = inlined_call_operand.vmem [shape: f32[1,128], index: 11, kind: input, shape index: {}]
  %s12 = inlined_call_operand.vmem [shape: bf16[128,1], index: 12, kind: input, shape index: {}]
  %s13 = inlined_call_operand.<no memory space> [shape: f32[1,1], index: 13, kind: input, shape index: {}]
  %s14 = inlined_call_operand.vmem [shape: f32[128,1], index: 14, kind: output, shape index: {}]
  %s15 = sld [smem:[#allocation0]]
  $region66: #{tpu_custom_call.1} parent=0
    _
  %s17 = ssub.s32 1, %s15
  %s18 = scalar_select 0, %s17, %s15
  %v19 = vstv %s13
  %20 = vst [vmem:[#allocation2] sm:$0x1] %v19
  // Predicated region
  $region2: #{tpu_custom_call.1} parent=0 // pred_check
    _
  $region3: #{tpu_custom_call.1} parent=0 // pred_check_branch
    %22 = sbr.rel (0) target = $region5
  $region4: #{tpu_custom_call.1} parent=0 // pred_region
    _
  $region5: #{tpu_custom_call.1} parent=0 // pred_fallthru
    _
  // Predicated region
  $region6: #{tpu_custom_call.1} parent=0 // pred_check
    _
  $region7: #{tpu_custom_call.1} parent=0 // pred_check_branch
    %24 = sbr.rel (0) target = $region9
  $region8: #{tpu_custom_call.1} parent=0 // pred_region
    _
  $region9: #{tpu_custom_call.1} parent=0 // pred_fallthru
    _
  // Predicated region
  $region10: #{tpu_custom_call.1} parent=0 // pred_check
    _
  $region11: #{tpu_custom_call.1} parent=0 // pred_check_branch
    %26 = sbr.rel (0) target = $region13
  $region12: #{tpu_custom_call.1} parent=0 // pred_region
    _
  $region13: #{tpu_custom_call.1} parent=0 // pred_fallthru
    _
  // Predicated region
  $region14: #{tpu_custom_call.1} parent=0 // pred_check
    _
  $region15: #{tpu_custom_call.1} parent=0 // pred_check_branch
    %28 = sbr.rel (0) target = $region17
  $region16: #{tpu_custom_call.1} parent=0 // pred_region
    _
  $region17: #{tpu_custom_call.1} parent=0 // pred_fallthru
    _
  // Predicated region
  $region18: #{tpu_custom_call.1} parent=0 // pred_check
    _
  $region19: #{tpu_custom_call.1} parent=0 // pred_check_branch
    %30 = sbr.rel (0) target = $region21
  $region20: #{tpu_custom_call.1} parent=0 // pred_region
    _
  $region21: #{tpu_custom_call.1} parent=0 // pred_fallthru
    _
  // Predicated region
  $region22: #{tpu_custom_call.1} parent=0 // pred_check
    _
  $region23: #{tpu_custom_call.1} parent=0 // pred_check_branch
    %32 = sbr.rel (0) target = $region25
  $region24: #{tpu_custom_call.1} parent=0 // pred_region
    _
  $region25: #{tpu_custom_call.1} parent=0 // pred_fallthru
    _
  // Predicated region
  $region26: #{tpu_custom_call.1} parent=0 // pred_check
    _
  $region27: #{tpu_custom_call.1} parent=0 // pred_check_branch
    %34 = sbr.rel (0) target = $region29
  $region28: #{tpu_custom_call.1} parent=0 // pred_region
    _
  $region29: #{tpu_custom_call.1} parent=0 // pred_fallthru
    _
  // Predicated region
  $region30: #{tpu_custom_call.1} parent=0 // pred_check
    _
  $region31: #{tpu_custom_call.1} parent=0 // pred_check_branch
    %36 = sbr.rel (0) target = $region33
  $region32: #{tpu_custom_call.1} parent=0 // pred_region
    _
  $region33: #{tpu_custom_call.1} parent=0 // pred_fallthru
    _
  // Predicated region
  $region34: #{tpu_custom_call.1} parent=0 // pred_check
    _
  $region35: #{tpu_custom_call.1} parent=0 // pred_check_branch
    %38 = sbr.rel (0) target = $region37
  $region36: #{tpu_custom_call.1} parent=0 // pred_region
    _
  $region37: #{tpu_custom_call.1} parent=0 // pred_fallthru
    _
  // Predicated region
  $region38: #{tpu_custom_call.1} parent=0 // pred_check
    _
  $region39: #{tpu_custom_call.1} parent=0 // pred_check_branch
    %40 = sbr.rel (0) target = $region41
  $region40: #{tpu_custom_call.1} parent=0 // pred_region
    _
  $region41: #{tpu_custom_call.1} parent=0 // pred_fallthru
    _
  // Predicated region
  $region42: #{tpu_custom_call.1} parent=0 // pred_check
    _
  $region43: #{tpu_custom_call.1} parent=0 // pred_check_branch
    %42 = sbr.rel (0) target = $region45
  $region44: #{tpu_custom_call.1} parent=0 // pred_region
    _
  $region45: #{tpu_custom_call.1} parent=0 // pred_fallthru
    _
  // Predicated region
  $region46: #{tpu_custom_call.1} parent=0 // pred_check
    _
  $region47: #{tpu_custom_call.1} parent=0 // pred_check_branch
    %44 = sbr.rel (0) target = $region49
  $region48: #{tpu_custom_call.1} parent=0 // pred_region
    _
  $region49: #{tpu_custom_call.1} parent=0 // pred_fallthru
    _
  // Predicated region
  $region50: #{tpu_custom_call.1} parent=0 // pred_check
    _
  $region51: #{tpu_custom_call.1} parent=0 // pred_check_branch
    %46 = sbr.rel (0) target = $region53
  $region52: #{tpu_custom_call.1} parent=0 // pred_region
    _
  $region53: #{tpu_custom_call.1} parent=0 // pred_fallthru
    _
  // Predicated region
  $region54: #{tpu_custom_call.1} parent=0 // pred_check
    _
  $region55: #{tpu_custom_call.1} parent=0 // pred_check_branch
    %48 = sbr.rel (0) target = $region57
  $region56: #{tpu_custom_call.1} parent=0 // pred_region
    _
  $region57: #{tpu_custom_call.1} parent=0 // pred_fallthru
    _
  %v50 = vld [vmem:[%s0] sm:$0xff]
  %v51 = vld [vmem:[%s0 + $0x8] sm:$0xff]
  %v52 = vld [vmem:[%s0 + $0x10] sm:$0xff]
  %v53 = vld [vmem:[%s0 + $0x18] sm:$0xff]
  %v54 = vld [vmem:[%s0 + $0x20] sm:$0xff]
  %v55 = vld [vmem:[%s0 + $0x28] sm:$0xff]
  %v56 = vld [vmem:[%s0 + $0x30] sm:$0xff]
  %v57 = vld [vmem:[%s0 + $0x38] sm:$0xff]
  %v58 = vld [vmem:[%s0 + $0x40] sm:$0xff]
  %v59 = vld [vmem:[%s0 + $0x48] sm:$0xff]
  %v60 = vld [vmem:[%s0 + $0x50] sm:$0xff]
  %v61 = vld [vmem:[%s0 + $0x58] sm:$0xff]
  %v62 = vld [vmem:[%s0 + $0x60] sm:$0xff]
  %v63 = vld [vmem:[%s0 + $0x68] sm:$0xff]
  %v64 = vld [vmem:[%s0 + $0x70] sm:$0xff]
  %v65 = vld [vmem:[%s0 + $0x78] sm:$0xff]
  %v66 = vpack.c.bf16 %v51, %v50
  %v67 = vpack.c.bf16 %v53, %v52
  %v68 = vpack.c.bf16 %v55, %v54
  %v69 = vpack.c.bf16 %v57, %v56
  %v70 = vpack.c.bf16 %v59, %v58
  %v71 = vpack.c.bf16 %v61, %v60
  %v72 = vpack.c.bf16 %v63, %v62
  %v73 = vpack.c.bf16 %v65, %v64
  %v74 = vld [vmem:[%s2] sm:$0xf]
  %v75 = vld [vmem:[%s2 + $0x4] sm:$0xf]
  %v76 = vld [vmem:[%s3] sm:$0x1]
  %v78 = vlaneseq
  %v79 = vshrl.u32 %v78, 7
  %v80 = vsub.s32 0, %v79
  %v81 = vrot.slane %v76, %v80
  %v85 = vunpack.c.l.b16 %v74
  %v86 = vunpack.c.l.b16 %v75
  %v87 = vpack.c.b16 %v86, %v85
  %vm89 = vcmask 130048
  %v91 = vsel %vm89, %v66, 0
  %v94 = vsel %vm89, %v67, 0
  %v97 = vsel %vm89, %v68, 0
  %v100 = vsel %vm89, %v69, 0
  %v103 = vsel %vm89, %v70, 0
  %v106 = vsel %vm89, %v71, 0
  %v109 = vsel %vm89, %v72, 0
  %v112 = vsel %vm89, %v73, 0
  %114 = vmatprep.subr.bf16.mxu0 0
  %115 = vmatpush1.bf16.msra.mxu0 0
  %116 = vmatprep.subr.bf16.mxu0 0
  %117 = vmatpush1.bf16.msra.mxu0 0
  %118 = vmatprep.subr.bf16.mxu0 0
  %119 = vmatpush1.bf16.msra.mxu0 0
  %120 = vmatprep.subr.bf16.mxu0 0
  %121 = vmatpush1.bf16.msra.mxu0 0
  %122 = vmatprep.subr.bf16.mxu0 0
  %123 = vmatpush1.bf16.msra.mxu0 0
  %124 = vmatprep.subr.bf16.mxu0 0
  %125 = vmatpush1.bf16.msra.mxu0 0
  %126 = vmatprep.subr.bf16.mxu0 0
  %127 = vmatpush1.bf16.msra.mxu0 0
  %128 = vmatprep.subr.bf16.mxu0 0
  %129 = vmatpush1.bf16.msra.mxu0 %v87
  %130 = vmatprep.subr.bf16.mxu0 0
  %131 = vmatpush2.bf16.msra.mxu0 0
  %132 = vmatprep.subr.bf16.mxu0 0
  %133 = vmatpush2.bf16.msra.mxu0 0
  %134 = vmatprep.subr.bf16.mxu0 0
  %135 = vmatpush2.bf16.msra.mxu0 0
  %136 = vmatprep.subr.bf16.mxu0 0
  %137 = vmatpush2.bf16.msra.mxu0 0
  %138 = vmatprep.subr.bf16.mxu0 0
  %139 = vmatpush2.bf16.msra.mxu0 0
  %140 = vmatprep.subr.bf16.mxu0 0
  %141 = vmatpush2.bf16.msra.mxu0 0
  %142 = vmatprep.subr.bf16.mxu0 0
  %143 = vmatpush2.bf16.msra.mxu0 0
  %144 = vmatprep.subr.bf16.mxu0 0
  %145 = vmatpush2.bf16.msra.mxu0 0
  %146 = vmatprep.mubr.bf16.mxu0 0
  %147 = vmatmul.mubr.bf16.gmra.mxu0 %v91
  %v148 = vpop.f32.mrf.mxu0
  %v149 = vadd.f32 %v81, %v148
  %v150 = vpop.f32.mrf.mxu0
  %v151 = vpop.f32.mrf.mxu0
  %v152 = vadd.f32 %v81, %v151
  %v153 = vpop.f32.mrf.mxu0
  %154 = vmatprep.mubr.bf16.mxu0 0
  %155 = vmatmul.mubr.bf16.gmra.mxu0 %v94
  %v156 = vpop.f32.mrf.mxu0
  %v157 = vadd.f32 %v81, %v156
  %v158 = vpop.f32.mrf.mxu0
  %v159 = vpop.f32.mrf.mxu0
  %v160 = vadd.f32 %v81, %v159
  %v161 = vpop.f32.mrf.mxu0
  %162 = vmatprep.mubr.bf16.mxu0 0
  %163 = vmatmul.mubr.bf16.gmra.mxu0 %v97
  %v164 = vpop.f32.mrf.mxu0
  %v165 = vadd.f32 %v81, %v164
  %v166 = vpop.f32.mrf.mxu0
  %v167 = vpop.f32.mrf.mxu0
  %v168 = vadd.f32 %v81, %v167
  %v169 = vpop.f32.mrf.mxu0
  %170 = vmatprep.mubr.bf16.mxu0 0
  %171 = vmatmul.mubr.bf16.gmra.mxu0 %v100
  %v172 = vpop.f32.mrf.mxu0
  %v173 = vadd.f32 %v81, %v172
  %v174 = vpop.f32.mrf.mxu0
  %v175 = vpop.f32.mrf.mxu0
  %v176 = vadd.f32 %v81, %v175
  %v177 = vpop.f32.mrf.mxu0
  %178 = vmatprep.mubr.bf16.mxu0 0
  %179 = vmatmul.mubr.bf16.gmra.mxu0 %v103
  %v180 = vpop.f32.mrf.mxu0
  %v181 = vadd.f32 %v81, %v180
  %v182 = vpop.f32.mrf.mxu0
  %v183 = vpop.f32.mrf.mxu0
  %v184 = vadd.f32 %v81, %v183
  %v185 = vpop.f32.mrf.mxu0
  %186 = vmatprep.mubr.bf16.mxu0 0
  %187 = vmatmul.mubr.bf16.gmra.mxu0 %v106
  %v188 = vpop.f32.mrf.mxu0
  %v189 = vadd.f32 %v81, %v188
  %v190 = vpop.f32.mrf.mxu0
  %v191 = vpop.f32.mrf.mxu0
  %v192 = vadd.f32 %v81, %v191
  %v193 = vpop.f32.mrf.mxu0
  %194 = vmatprep.mubr.bf16.mxu0 0
  %195 = vmatmul.mubr.bf16.gmra.mxu0 %v109
  %v196 = vpop.f32.mrf.mxu0
  %v197 = vadd.f32 %v81, %v196
  %v198 = vpop.f32.mrf.mxu0
  %v199 = vpop.f32.mrf.mxu0
  %v200 = vadd.f32 %v81, %v199
  %v201 = vpop.f32.mrf.mxu0
  %202 = vmatprep.mubr.bf16.mxu0 0
  %203 = vmatmul.mubr.bf16.gmra.mxu0 %v112
  %v204 = vpop.f32.mrf.mxu0
  %v205 = vadd.f32 %v81, %v204
  %v206 = vpop.f32.mrf.mxu0
  %v207 = vpop.f32.mrf.mxu0
  %v208 = vadd.f32 %v81, %v207
  %v209 = vpop.f32.mrf.mxu0
  %210 = vdwg.mxu0
  %v211 = vld [vmem:[%s4] sm:$0x1]
  %v212 = vld [vmem:[%s5] sm:$0x1]
  %213 = vadd.xlane.f32.xlu0 %v149
  %v214 = vpop.xlane.xlu0 %213
  %215 = vadd.xlane.f32.xlu0 %v152
  %v216 = vpop.xlane.xlu0 %215
  %217 = vadd.xlane.f32.xlu0 %v157
  %v218 = vpop.xlane.xlu0 %217
  %219 = vadd.xlane.f32.xlu0 %v160
  %v220 = vpop.xlane.xlu0 %219
  %221 = vadd.xlane.f32.xlu0 %v165
  %v222 = vpop.xlane.xlu0 %221
  %223 = vadd.xlane.f32.xlu0 %v168
  %v224 = vpop.xlane.xlu0 %223
  %225 = vadd.xlane.f32.xlu0 %v173
  %v226 = vpop.xlane.xlu0 %225
  %227 = vadd.xlane.f32.xlu0 %v176
  %v228 = vpop.xlane.xlu0 %227
  %229 = vadd.xlane.f32.xlu0 %v181
  %v230 = vpop.xlane.xlu0 %229
  %231 = vadd.xlane.f32.xlu0 %v184
  %v232 = vpop.xlane.xlu0 %231
  %233 = vadd.xlane.f32.xlu0 %v189
  %v234 = vpop.xlane.xlu0 %233
  %235 = vadd.xlane.f32.xlu0 %v192
  %v236 = vpop.xlane.xlu0 %235
  %237 = vadd.xlane.f32.xlu0 %v197
  %v238 = vpop.xlane.xlu0 %237
  %239 = vadd.xlane.f32.xlu0 %v200
  %v240 = vpop.xlane.xlu0 %239
  %241 = vadd.xlane.f32.xlu0 %v205
  %v242 = vpop.xlane.xlu0 %241
  %243 = vadd.xlane.f32.xlu0 %v208
  %v244 = vpop.xlane.xlu0 %243
  %v245 = vmul.f32 %v214, 0.015625
  %v246 = vmul.f32 %v216, 0.015625
  %v247 = vmul.f32 %v218, 0.015625
  %v248 = vmul.f32 %v220, 0.015625
  %v249 = vmul.f32 %v222, 0.015625
  %v250 = vmul.f32 %v224, 0.015625
  %v251 = vmul.f32 %v226, 0.015625
  %v252 = vmul.f32 %v228, 0.015625
  %v253 = vmul.f32 %v230, 0.015625
  %v254 = vmul.f32 %v232, 0.015625
  %v255 = vmul.f32 %v234, 0.015625
  %v256 = vmul.f32 %v236, 0.015625
  %v257 = vmul.f32 %v238, 0.015625
  %v258 = vmul.f32 %v240, 0.015625
  %v259 = vmul.f32 %v242, 0.015625
  %v260 = vmul.f32 %v244, 0.015625
  %v261 = vsub.f32 %v149, %v245
  %v262 = vsub.f32 %v152, %v246
  %v263 = vsub.f32 %v157, %v247
  %v264 = vsub.f32 %v160, %v248
  %v265 = vsub.f32 %v165, %v249
  %v266 = vsub.f32 %v168, %v250
  %v267 = vsub.f32 %v173, %v251
  %v268 = vsub.f32 %v176, %v252
  %v269 = vsub.f32 %v181, %v253
  %v270 = vsub.f32 %v184, %v254
  %v271 = vsub.f32 %v189, %v255
  %v272 = vsub.f32 %v192, %v256
  %v273 = vsub.f32 %v197, %v257
  %v274 = vsub.f32 %v200, %v258
  %v275 = vsub.f32 %v205, %v259
  %v276 = vsub.f32 %v208, %v260
  %v277 = vmul.f32 %v261, %v261
  %v278 = vmul.f32 %v262, %v262
  %v279 = vmul.f32 %v263, %v263
  %v280 = vmul.f32 %v264, %v264
  %v281 = vmul.f32 %v265, %v265
  %v282 = vmul.f32 %v266, %v266
  %v283 = vmul.f32 %v267, %v267
  %v284 = vmul.f32 %v268, %v268
  %v285 = vmul.f32 %v269, %v269
  %v286 = vmul.f32 %v270, %v270
  %v287 = vmul.f32 %v271, %v271
  %v288 = vmul.f32 %v272, %v272
  %v289 = vmul.f32 %v273, %v273
  %v290 = vmul.f32 %v274, %v274
  %v291 = vmul.f32 %v275, %v275
  %v292 = vmul.f32 %v276, %v276
  %293 = vadd.xlane.f32.xlu0 %v277
  %v294 = vpop.xlane.xlu0 %293
  %295 = vadd.xlane.f32.xlu0 %v278
  %v296 = vpop.xlane.xlu0 %295
  %297 = vadd.xlane.f32.xlu0 %v279
  %v298 = vpop.xlane.xlu0 %297
  %299 = vadd.xlane.f32.xlu0 %v280
  %v300 = vpop.xlane.xlu0 %299
  %301 = vadd.xlane.f32.xlu0 %v281
  %v302 = vpop.xlane.xlu0 %301
  %303 = vadd.xlane.f32.xlu0 %v282
  %v304 = vpop.xlane.xlu0 %303
  %305 = vadd.xlane.f32.xlu0 %v283
  %v306 = vpop.xlane.xlu0 %305
  %307 = vadd.xlane.f32.xlu0 %v284
  %v308 = vpop.xlane.xlu0 %307
  %309 = vadd.xlane.f32.xlu0 %v285
  %v310 = vpop.xlane.xlu0 %309
  %311 = vadd.xlane.f32.xlu0 %v286
  %v312 = vpop.xlane.xlu0 %311
  %313 = vadd.xlane.f32.xlu0 %v287
  %v314 = vpop.xlane.xlu0 %313
  %315 = vadd.xlane.f32.xlu0 %v288
  %v316 = vpop.xlane.xlu0 %315
  %317 = vadd.xlane.f32.xlu0 %v289
  %v318 = vpop.xlane.xlu0 %317
  %319 = vadd.xlane.f32.xlu0 %v290
  %v320 = vpop.xlane.xlu0 %319
  %321 = vadd.xlane.f32.xlu0 %v291
  %v322 = vpop.xlane.xlu0 %321
  %323 = vadd.xlane.f32.xlu0 %v292
  %v324 = vpop.xlane.xlu0 %323
  %v325 = vmul.f32 %v245, %v245
  %v326 = vmul.f32 %v246, %v246
  %v327 = vmul.f32 %v247, %v247
  %v328 = vmul.f32 %v248, %v248
  %v329 = vmul.f32 %v249, %v249
  %v330 = vmul.f32 %v250, %v250
  %v331 = vmul.f32 %v251, %v251
  %v332 = vmul.f32 %v252, %v252
  %v333 = vmul.f32 %v253, %v253
  %v334 = vmul.f32 %v254, %v254
  %v335 = vmul.f32 %v255, %v255
  %v336 = vmul.f32 %v256, %v256
  %v337 = vmul.f32 %v257, %v257
  %v338 = vmul.f32 %v258, %v258
  %v339 = vmul.f32 %v259, %v259
  %v340 = vmul.f32 %v260, %v260
  %v341 = vmul.f32 %v325, 64.0
  %v342 = vmul.f32 %v326, 64.0
  %v343 = vmul.f32 %v327, 64.0
  %v344 = vmul.f32 %v328, 64.0
  %v345 = vmul.f32 %v329, 64.0
  %v346 = vmul.f32 %v330, 64.0
  %v347 = vmul.f32 %v331, 64.0
  %v348 = vmul.f32 %v332, 64.0
  %v349 = vmul.f32 %v333, 64.0
  %v350 = vmul.f32 %v334, 64.0
  %v351 = vmul.f32 %v335, 64.0
  %v352 = vmul.f32 %v336, 64.0
  %v353 = vmul.f32 %v337, 64.0
  %v354 = vmul.f32 %v338, 64.0
  %v355 = vmul.f32 %v339, 64.0
  %v356 = vmul.f32 %v340, 64.0
  %v357 = vsub.f32 %v294, %v341
  %v358 = vsub.f32 %v296, %v342
  %v359 = vsub.f32 %v298, %v343
  %v360 = vsub.f32 %v300, %v344
  %v361 = vsub.f32 %v302, %v345
  %v362 = vsub.f32 %v304, %v346
  %v363 = vsub.f32 %v306, %v347
  %v364 = vsub.f32 %v308, %v348
  %v365 = vsub.f32 %v310, %v349
  %v366 = vsub.f32 %v312, %v350
  %v367 = vsub.f32 %v314, %v351
  %v368 = vsub.f32 %v316, %v352
  %v369 = vsub.f32 %v318, %v353
  %v370 = vsub.f32 %v320, %v354
  %v371 = vsub.f32 %v322, %v355
  %v372 = vsub.f32 %v324, %v356
  %v373 = vmul.f32 %v357, 0.015625
  %v374 = vmul.f32 %v358, 0.015625
  %v375 = vmul.f32 %v359, 0.015625
  %v376 = vmul.f32 %v360, 0.015625
  %v377 = vmul.f32 %v361, 0.015625
  %v378 = vmul.f32 %v362, 0.015625
  %v379 = vmul.f32 %v363, 0.015625
  %v380 = vmul.f32 %v364, 0.015625
  %v381 = vmul.f32 %v365, 0.015625
  %v382 = vmul.f32 %v366, 0.015625
  %v383 = vmul.f32 %v367, 0.015625
  %v384 = vmul.f32 %v368, 0.015625
  %v385 = vmul.f32 %v369, 0.015625
  %v386 = vmul.f32 %v370, 0.015625
  %v387 = vmul.f32 %v371, 0.015625
  %v388 = vmul.f32 %v372, 0.015625
  %v389 = vadd.f32 %v373, 1e-05
  %v390 = vadd.f32 %v374, 1e-05
  %v391 = vadd.f32 %v375, 1e-05
  %v392 = vadd.f32 %v376, 1e-05
  %v393 = vadd.f32 %v377, 1e-05
  %v394 = vadd.f32 %v378, 1e-05
  %v395 = vadd.f32 %v379, 1e-05
  %v396 = vadd.f32 %v380, 1e-05
  %v397 = vadd.f32 %v381, 1e-05
  %v398 = vadd.f32 %v382, 1e-05
  %v399 = vadd.f32 %v383, 1e-05
  %v400 = vadd.f32 %v384, 1e-05
  %v401 = vadd.f32 %v385, 1e-05
  %v402 = vadd.f32 %v386, 1e-05
  %v403 = vadd.f32 %v387, 1e-05
  %v404 = vadd.f32 %v388, 1e-05
  %v405 = vrsqrt.pop %v389
  %v406 = vrsqrt.pop %v390
  %v407 = vrsqrt.pop %v391
  %v408 = vrsqrt.pop %v392
  %v409 = vrsqrt.pop %v393
  %v410 = vrsqrt.pop %v394
  %v411 = vrsqrt.pop %v395
  %v412 = vrsqrt.pop %v396
  %v413 = vrsqrt.pop %v397
  %v414 = vrsqrt.pop %v398
  %v415 = vrsqrt.pop %v399
  %v416 = vrsqrt.pop %v400
  %v417 = vrsqrt.pop %v401
  %v418 = vrsqrt.pop %v402
  %v419 = vrsqrt.pop %v403
  %v420 = vrsqrt.pop %v404
  %v421 = vmul.f32 %v261, %v405
  %v422 = vmul.f32 %v262, %v406
  %v423 = vmul.f32 %v263, %v407
  %v424 = vmul.f32 %v264, %v408
  %v425 = vmul.f32 %v265, %v409
  %v426 = vmul.f32 %v266, %v410
  %v427 = vmul.f32 %v267, %v411
  %v428 = vmul.f32 %v268, %v412
  %v429 = vmul.f32 %v269, %v413
  %v430 = vmul.f32 %v270, %v414
  %v431 = vmul.f32 %v271, %v415
  %v432 = vmul.f32 %v272, %v416
  %v433 = vmul.f32 %v273, %v417
  %v434 = vmul.f32 %v274, %v418
  %v435 = vmul.f32 %v275, %v419
  %v436 = vmul.f32 %v276, %v420
  %v438 = vlaneseq
  %v439 = vshrl.u32 %v438, 7
  %v440 = vsub.s32 0, %v439
  %v441 = vrot.slane %v211, %v440
  %v443 = vmul.f32 %v421, %v441
  %v444 = vmul.f32 %v422, %v441
  %v445 = vmul.f32 %v423, %v441
  %v446 = vmul.f32 %v424, %v441
  %v447 = vmul.f32 %v425, %v441
  %v448 = vmul.f32 %v426, %v441
  %v449 = vmul.f32 %v427, %v441
  %v450 = vmul.f32 %v428, %v441
  %v451 = vmul.f32 %v429, %v441
  %v452 = vmul.f32 %v430, %v441
  %v453 = vmul.f32 %v431, %v441
  %v454 = vmul.f32 %v432, %v441
  %v455 = vmul.f32 %v433, %v441
  %v456 = vmul.f32 %v434, %v441
  %v457 = vmul.f32 %v435, %v441
  %v458 = vmul.f32 %v436, %v441
  %v460 = vlaneseq
  %v461 = vshrl.u32 %v460, 7
  %v462 = vsub.s32 0, %v461
  %v463 = vrot.slane %v212, %v462
  %v465 = vadd.f32 %v443, %v463
  %v466 = vadd.f32 %v444, %v463
  %v467 = vadd.f32 %v445, %v463
  %v468 = vadd.f32 %v446, %v463
  %v469 = vadd.f32 %v447, %v463
  %v470 = vadd.f32 %v448, %v463
  %v471 = vadd.f32 %v449, %v463
  %v472 = vadd.f32 %v450, %v463
  %v473 = vadd.f32 %v451, %v463
  %v474 = vadd.f32 %v452, %v463
  %v475 = vadd.f32 %v453, %v463
  %v476 = vadd.f32 %v454, %v463
  %v477 = vadd.f32 %v455, %v463
  %v478 = vadd.f32 %v456, %v463
  %v479 = vadd.f32 %v457, %v463
  %v480 = vadd.f32 %v458, %v463
  %v481 = vmax.f32 %v465, 0.0
  %v482 = vmax.f32 %v466, 0.0
  %v483 = vmax.f32 %v467, 0.0
  %v484 = vmax.f32 %v468, 0.0
  %v485 = vmax.f32 %v469, 0.0
  %v486 = vmax.f32 %v470, 0.0
  %v487 = vmax.f32 %v471, 0.0
  %v488 = vmax.f32 %v472, 0.0
  %v489 = vmax.f32 %v473, 0.0
  %v490 = vmax.f32 %v474, 0.0
  %v491 = vmax.f32 %v475, 0.0
  %v492 = vmax.f32 %v476, 0.0
  %v493 = vmax.f32 %v477, 0.0
  %v494 = vmax.f32 %v478, 0.0
  %v495 = vmax.f32 %v479, 0.0
  %v496 = vmax.f32 %v480, 0.0
  %v497 = vpack.c.bf16 %v482, %v481
  %v498 = vpack.c.bf16 %v484, %v483
  %v499 = vpack.c.bf16 %v486, %v485
  %v500 = vpack.c.bf16 %v488, %v487
  %v501 = vpack.c.bf16 %v490, %v489
  %v502 = vpack.c.bf16 %v492, %v491
  %v503 = vpack.c.bf16 %v494, %v493
  %v504 = vpack.c.bf16 %v496, %v495
  %v505 = vld [vmem:[%s6] sm:$0xf]
  %v506 = vld [vmem:[%s6 + $0x4] sm:$0xf]
  %v507 = vld [vmem:[%s6 + $0x8] sm:$0xf]
  %v508 = vld [vmem:[%s6 + $0xc] sm:$0xf]
  %v509 = vld [vmem:[%s6 + $0x10] sm:$0xf]
  %v510 = vld [vmem:[%s6 + $0x14] sm:$0xf]
  %v511 = vld [vmem:[%s6 + $0x18] sm:$0xf]
  %v512 = vld [vmem:[%s6 + $0x1c] sm:$0xf]
  %v513 = vld [vmem:[%s6 + $0x20] sm:$0xf]
  %v514 = vld [vmem:[%s6 + $0x24] sm:$0xf]
  %v515 = vld [vmem:[%s6 + $0x28] sm:$0xf]
  %v516 = vld [vmem:[%s6 + $0x2c] sm:$0xf]
  %v517 = vld [vmem:[%s6 + $0x30] sm:$0xf]
  %v518 = vld [vmem:[%s6 + $0x34] sm:$0xf]
  %v519 = vld [vmem:[%s6 + $0x38] sm:$0xf]
  %v520 = vld [vmem:[%s6 + $0x3c] sm:$0xf]
  %v521 = vld [vmem:[%s7] sm:$0x1]
  %v523 = vlaneseq
  %v524 = vshrl.u32 %v523, 7
  %v525 = vsub.s32 0, %v524
  %v526 = vrot.slane %v521, %v525
  %v544 = vunpack.c.l.b16 %v505
  %v545 = vunpack.c.l.b16 %v506
  %v546 = vunpack.c.l.b16 %v507
  %v547 = vunpack.c.l.b16 %v508
  %v548 = vunpack.c.l.b16 %v509
  %v549 = vunpack.c.l.b16 %v510
  %v550 = vunpack.c.l.b16 %v511
  %v551 = vunpack.c.l.b16 %v512
  %v552 = vunpack.c.l.b16 %v513
  %v553 = vunpack.c.l.b16 %v514
  %v554 = vunpack.c.l.b16 %v515
  %v555 = vunpack.c.l.b16 %v516
  %v556 = vunpack.c.l.b16 %v517
  %v557 = vunpack.c.l.b16 %v518
  %v558 = vunpack.c.l.b16 %v519
  %v559 = vunpack.c.l.b16 %v520
  %v560 = vpack.c.b16 %v545, %v544
  %v561 = vpack.c.b16 %v547, %v546
  %v562 = vpack.c.b16 %v549, %v548
  %v563 = vpack.c.b16 %v551, %v550
  %v564 = vpack.c.b16 %v553, %v552
  %v565 = vpack.c.b16 %v555, %v554
  %v566 = vpack.c.b16 %v557, %v556
  %v567 = vpack.c.b16 %v559, %v558
  %576 = vmatprep.subr.bf16.mxu0 0
  %577 = vmatpush1.bf16.msra.mxu0 %v567
  %578 = vmatprep.subr.bf16.mxu0 0
  %579 = vmatpush1.bf16.msra.mxu0 %v566
  %580 = vmatprep.subr.bf16.mxu0 0
  %581 = vmatpush1.bf16.msra.mxu0 %v565
  %582 = vmatprep.subr.bf16.mxu0 0
  %583 = vmatpush1.bf16.msra.mxu0 %v564
  %584 = vmatprep.subr.bf16.mxu0 0
  %585 = vmatpush1.bf16.msra.mxu0 %v563
  %586 = vmatprep.subr.bf16.mxu0 0
  %587 = vmatpush1.bf16.msra.mxu0 %v562
  %588 = vmatprep.subr.bf16.mxu0 0
  %589 = vmatpush1.bf16.msra.mxu0 %v561
  %590 = vmatprep.subr.bf16.mxu0 0
  %591 = vmatpush1.bf16.msra.mxu0 %v560
  %592 = vmatprep.subr.bf16.mxu0 0
  %593 = vmatpush2.bf16.msra.mxu0 0
  %594 = vmatprep.subr.bf16.mxu0 0
  %595 = vmatpush2.bf16.msra.mxu0 0
  %596 = vmatprep.subr.bf16.mxu0 0
  %597 = vmatpush2.bf16.msra.mxu0 0
  %598 = vmatprep.subr.bf16.mxu0 0
  %599 = vmatpush2.bf16.msra.mxu0 0
  %600 = vmatprep.subr.bf16.mxu0 0
  %601 = vmatpush2.bf16.msra.mxu0 0
  %602 = vmatprep.subr.bf16.mxu0 0
  %603 = vmatpush2.bf16.msra.mxu0 0
  %604 = vmatprep.subr.bf16.mxu0 0
  %605 = vmatpush2.bf16.msra.mxu0 0
  %606 = vmatprep.subr.bf16.mxu0 0
  %607 = vmatpush2.bf16.msra.mxu0 0
  %608 = vmatprep.mubr.bf16.mxu0 0
  %609 = vmatmul.mubr.bf16.gmra.mxu0 %v497
  %v610 = vpop.f32.mrf.mxu0
  %v611 = vadd.f32 %v526, %v610
  %v612 = vpop.f32.mrf.mxu0
  %v613 = vpop.f32.mrf.mxu0
  %v614 = vadd.f32 %v526, %v613
  %v615 = vpop.f32.mrf.mxu0
  %616 = vmatprep.mubr.bf16.mxu0 0
  %617 = vmatmul.mubr.bf16.gmra.mxu0 %v498
  %v618 = vpop.f32.mrf.mxu0
  %v619 = vadd.f32 %v526, %v618
  %v620 = vpop.f32.mrf.mxu0
  %v621 = vpop.f32.mrf.mxu0
  %v622 = vadd.f32 %v526, %v621
  %v623 = vpop.f32.mrf.mxu0
  %624 = vmatprep.mubr.bf16.mxu0 0
  %625 = vmatmul.mubr.bf16.gmra.mxu0 %v499
  %v626 = vpop.f32.mrf.mxu0
  %v627 = vadd.f32 %v526, %v626
  %v628 = vpop.f32.mrf.mxu0
  %v629 = vpop.f32.mrf.mxu0
  %v630 = vadd.f32 %v526, %v629
  %v631 = vpop.f32.mrf.mxu0
  %632 = vmatprep.mubr.bf16.mxu0 0
  %633 = vmatmul.mubr.bf16.gmra.mxu0 %v500
  %v634 = vpop.f32.mrf.mxu0
  %v635 = vadd.f32 %v526, %v634
  %v636 = vpop.f32.mrf.mxu0
  %v637 = vpop.f32.mrf.mxu0
  %v638 = vadd.f32 %v526, %v637
  %v639 = vpop.f32.mrf.mxu0
  %640 = vmatprep.mubr.bf16.mxu0 0
  %641 = vmatmul.mubr.bf16.gmra.mxu0 %v501
  %v642 = vpop.f32.mrf.mxu0
  %v643 = vadd.f32 %v526, %v642
  %v644 = vpop.f32.mrf.mxu0
  %v645 = vpop.f32.mrf.mxu0
  %v646 = vadd.f32 %v526, %v645
  %v647 = vpop.f32.mrf.mxu0
  %648 = vmatprep.mubr.bf16.mxu0 0
  %649 = vmatmul.mubr.bf16.gmra.mxu0 %v502
  %v650 = vpop.f32.mrf.mxu0
  %v651 = vadd.f32 %v526, %v650
  %v652 = vpop.f32.mrf.mxu0
  %v653 = vpop.f32.mrf.mxu0
  %v654 = vadd.f32 %v526, %v653
  %v655 = vpop.f32.mrf.mxu0
  %656 = vmatprep.mubr.bf16.mxu0 0
  %657 = vmatmul.mubr.bf16.gmra.mxu0 %v503
  %v658 = vpop.f32.mrf.mxu0
  %v659 = vadd.f32 %v526, %v658
  %v660 = vpop.f32.mrf.mxu0
  %v661 = vpop.f32.mrf.mxu0
  %v662 = vadd.f32 %v526, %v661
  %v663 = vpop.f32.mrf.mxu0
  %664 = vmatprep.mubr.bf16.mxu0 0
  %665 = vmatmul.mubr.bf16.gmra.mxu0 %v504
  %v666 = vpop.f32.mrf.mxu0
  %v667 = vadd.f32 %v526, %v666
  %v668 = vpop.f32.mrf.mxu0
  %v669 = vpop.f32.mrf.mxu0
  %v670 = vadd.f32 %v526, %v669
  %v671 = vpop.f32.mrf.mxu0
  %672 = vdwg.mxu0
  %v673 = vld [vmem:[%s8] sm:$0x1]
  %v674 = vld [vmem:[%s9] sm:$0x1]
  %675 = vadd.xlane.f32.xlu0 %v611
  %v676 = vpop.xlane.xlu0 %675
  %677 = vadd.xlane.f32.xlu0 %v614
  %v678 = vpop.xlane.xlu0 %677
  %679 = vadd.xlane.f32.xlu0 %v619
  %v680 = vpop.xlane.xlu0 %679
  %681 = vadd.xlane.f32.xlu0 %v622
  %v682 = vpop.xlane.xlu0 %681
  %683 = vadd.xlane.f32.xlu0 %v627
  %v684 = vpop.xlane.xlu0 %683
  %685 = vadd.xlane.f32.xlu0 %v630
  %v686 = vpop.xlane.xlu0 %685
  %687 = vadd.xlane.f32.xlu0 %v635
  %v688 = vpop.xlane.xlu0 %687
  %689 = vadd.xlane.f32.xlu0 %v638
  %v690 = vpop.xlane.xlu0 %689
  %691 = vadd.xlane.f32.xlu0 %v643
  %v692 = vpop.xlane.xlu0 %691
  %693 = vadd.xlane.f32.xlu0 %v646
  %v694 = vpop.xlane.xlu0 %693
  %695 = vadd.xlane.f32.xlu0 %v651
  %v696 = vpop.xlane.xlu0 %695
  %697 = vadd.xlane.f32.xlu0 %v654
  %v698 = vpop.xlane.xlu0 %697
  %699 = vadd.xlane.f32.xlu0 %v659
  %v700 = vpop.xlane.xlu0 %699
  %701 = vadd.xlane.f32.xlu0 %v662
  %v702 = vpop.xlane.xlu0 %701
  %703 = vadd.xlane.f32.xlu0 %v667
  %v704 = vpop.xlane.xlu0 %703
  %705 = vadd.xlane.f32.xlu0 %v670
  %v706 = vpop.xlane.xlu0 %705
  %v707 = vmul.f32 %v676, 0.03125
  %v708 = vmul.f32 %v678, 0.03125
  %v709 = vmul.f32 %v680, 0.03125
  %v710 = vmul.f32 %v682, 0.03125
  %v711 = vmul.f32 %v684, 0.03125
  %v712 = vmul.f32 %v686, 0.03125
  %v713 = vmul.f32 %v688, 0.03125
  %v714 = vmul.f32 %v690, 0.03125
  %v715 = vmul.f32 %v692, 0.03125
  %v716 = vmul.f32 %v694, 0.03125
  %v717 = vmul.f32 %v696, 0.03125
  %v718 = vmul.f32 %v698, 0.03125
  %v719 = vmul.f32 %v700, 0.03125
  %v720 = vmul.f32 %v702, 0.03125
  %v721 = vmul.f32 %v704, 0.03125
  %v722 = vmul.f32 %v706, 0.03125
  %v723 = vsub.f32 %v611, %v707
  %v724 = vsub.f32 %v614, %v708
  %v725 = vsub.f32 %v619, %v709
  %v726 = vsub.f32 %v622, %v710
  %v727 = vsub.f32 %v627, %v711
  %v728 = vsub.f32 %v630, %v712
  %v729 = vsub.f32 %v635, %v713
  %v730 = vsub.f32 %v638, %v714
  %v731 = vsub.f32 %v643, %v715
  %v732 = vsub.f32 %v646, %v716
  %v733 = vsub.f32 %v651, %v717
  %v734 = vsub.f32 %v654, %v718
  %v735 = vsub.f32 %v659, %v719
  %v736 = vsub.f32 %v662, %v720
  %v737 = vsub.f32 %v667, %v721
  %v738 = vsub.f32 %v670, %v722
  %v739 = vmul.f32 %v723, %v723
  %v740 = vmul.f32 %v724, %v724
  %v741 = vmul.f32 %v725, %v725
  %v742 = vmul.f32 %v726, %v726
  %v743 = vmul.f32 %v727, %v727
  %v744 = vmul.f32 %v728, %v728
  %v745 = vmul.f32 %v729, %v729
  %v746 = vmul.f32 %v730, %v730
  %v747 = vmul.f32 %v731, %v731
  %v748 = vmul.f32 %v732, %v732
  %v749 = vmul.f32 %v733, %v733
  %v750 = vmul.f32 %v734, %v734
  %v751 = vmul.f32 %v735, %v735
  %v752 = vmul.f32 %v736, %v736
  %v753 = vmul.f32 %v737, %v737
  %v754 = vmul.f32 %v738, %v738
  %755 = vadd.xlane.f32.xlu0 %v739
  %v756 = vpop.xlane.xlu0 %755
  %757 = vadd.xlane.f32.xlu0 %v740
  %v758 = vpop.xlane.xlu0 %757
  %759 = vadd.xlane.f32.xlu0 %v741
  %v760 = vpop.xlane.xlu0 %759
  %761 = vadd.xlane.f32.xlu0 %v742
  %v762 = vpop.xlane.xlu0 %761
  %763 = vadd.xlane.f32.xlu0 %v743
  %v764 = vpop.xlane.xlu0 %763
  %765 = vadd.xlane.f32.xlu0 %v744
  %v766 = vpop.xlane.xlu0 %765
  %767 = vadd.xlane.f32.xlu0 %v745
  %v768 = vpop.xlane.xlu0 %767
  %769 = vadd.xlane.f32.xlu0 %v746
  %v770 = vpop.xlane.xlu0 %769
  %771 = vadd.xlane.f32.xlu0 %v747
  %v772 = vpop.xlane.xlu0 %771
  %773 = vadd.xlane.f32.xlu0 %v748
  %v774 = vpop.xlane.xlu0 %773
  %775 = vadd.xlane.f32.xlu0 %v749
  %v776 = vpop.xlane.xlu0 %775
  %777 = vadd.xlane.f32.xlu0 %v750
  %v778 = vpop.xlane.xlu0 %777
  %779 = vadd.xlane.f32.xlu0 %v751
  %v780 = vpop.xlane.xlu0 %779
  %781 = vadd.xlane.f32.xlu0 %v752
  %v782 = vpop.xlane.xlu0 %781
  %783 = vadd.xlane.f32.xlu0 %v753
  %v784 = vpop.xlane.xlu0 %783
  %785 = vadd.xlane.f32.xlu0 %v754
  %v786 = vpop.xlane.xlu0 %785
  %v787 = vmul.f32 %v707, %v707
  %v788 = vmul.f32 %v708, %v708
  %v789 = vmul.f32 %v709, %v709
  %v790 = vmul.f32 %v710, %v710
  %v791 = vmul.f32 %v711, %v711
  %v792 = vmul.f32 %v712, %v712
  %v793 = vmul.f32 %v713, %v713
  %v794 = vmul.f32 %v714, %v714
  %v795 = vmul.f32 %v715, %v715
  %v796 = vmul.f32 %v716, %v716
  %v797 = vmul.f32 %v717, %v717
  %v798 = vmul.f32 %v718, %v718
  %v799 = vmul.f32 %v719, %v719
  %v800 = vmul.f32 %v720, %v720
  %v801 = vmul.f32 %v721, %v721
  %v802 = vmul.f32 %v722, %v722
  %v803 = vmul.f32 %v787, 96.0
  %v804 = vmul.f32 %v788, 96.0
  %v805 = vmul.f32 %v789, 96.0
  %v806 = vmul.f32 %v790, 96.0
  %v807 = vmul.f32 %v791, 96.0
  %v808 = vmul.f32 %v792, 96.0
  %v809 = vmul.f32 %v793, 96.0
  %v810 = vmul.f32 %v794, 96.0
  %v811 = vmul.f32 %v795, 96.0
  %v812 = vmul.f32 %v796, 96.0
  %v813 = vmul.f32 %v797, 96.0
  %v814 = vmul.f32 %v798, 96.0
  %v815 = vmul.f32 %v799, 96.0
  %v816 = vmul.f32 %v800, 96.0
  %v817 = vmul.f32 %v801, 96.0
  %v818 = vmul.f32 %v802, 96.0
  %v819 = vsub.f32 %v756, %v803
  %v820 = vsub.f32 %v758, %v804
  %v821 = vsub.f32 %v760, %v805
  %v822 = vsub.f32 %v762, %v806
  %v823 = vsub.f32 %v764, %v807
  %v824 = vsub.f32 %v766, %v808
  %v825 = vsub.f32 %v768, %v809
  %v826 = vsub.f32 %v770, %v810
  %v827 = vsub.f32 %v772, %v811
  %v828 = vsub.f32 %v774, %v812
  %v829 = vsub.f32 %v776, %v813
  %v830 = vsub.f32 %v778, %v814
  %v831 = vsub.f32 %v780, %v815
  %v832 = vsub.f32 %v782, %v816
  %v833 = vsub.f32 %v784, %v817
  %v834 = vsub.f32 %v786, %v818
  %v835 = vmul.f32 %v819, 0.03125
  %v836 = vmul.f32 %v820, 0.03125
  %v837 = vmul.f32 %v821, 0.03125
  %v838 = vmul.f32 %v822, 0.03125
  %v839 = vmul.f32 %v823, 0.03125
  %v840 = vmul.f32 %v824, 0.03125
  %v841 = vmul.f32 %v825, 0.03125
  %v842 = vmul.f32 %v826, 0.03125
  %v843 = vmul.f32 %v827, 0.03125
  %v844 = vmul.f32 %v828, 0.03125
  %v845 = vmul.f32 %v829, 0.03125
  %v846 = vmul.f32 %v830, 0.03125
  %v847 = vmul.f32 %v831, 0.03125
  %v848 = vmul.f32 %v832, 0.03125
  %v849 = vmul.f32 %v833, 0.03125
  %v850 = vmul.f32 %v834, 0.03125
  %v851 = vadd.f32 %v835, 1e-05
  %v852 = vadd.f32 %v836, 1e-05
  %v853 = vadd.f32 %v837, 1e-05
  %v854 = vadd.f32 %v838, 1e-05
  %v855 = vadd.f32 %v839, 1e-05
  %v856 = vadd.f32 %v840, 1e-05
  %v857 = vadd.f32 %v841, 1e-05
  %v858 = vadd.f32 %v842, 1e-05
  %v859 = vadd.f32 %v843, 1e-05
  %v860 = vadd.f32 %v844, 1e-05
  %v861 = vadd.f32 %v845, 1e-05
  %v862 = vadd.f32 %v846, 1e-05
  %v863 = vadd.f32 %v847, 1e-05
  %v864 = vadd.f32 %v848, 1e-05
  %v865 = vadd.f32 %v849, 1e-05
  %v866 = vadd.f32 %v850, 1e-05
  %v867 = vrsqrt.pop %v851
  %v868 = vrsqrt.pop %v852
  %v869 = vrsqrt.pop %v853
  %v870 = vrsqrt.pop %v854
  %v871 = vrsqrt.pop %v855
  %v872 = vrsqrt.pop %v856
  %v873 = vrsqrt.pop %v857
  %v874 = vrsqrt.pop %v858
  %v875 = vrsqrt.pop %v859
  %v876 = vrsqrt.pop %v860
  %v877 = vrsqrt.pop %v861
  %v878 = vrsqrt.pop %v862
  %v879 = vrsqrt.pop %v863
  %v880 = vrsqrt.pop %v864
  %v881 = vrsqrt.pop %v865
  %v882 = vrsqrt.pop %v866
  %v883 = vmul.f32 %v723, %v867
  %v884 = vmul.f32 %v724, %v868
  %v885 = vmul.f32 %v725, %v869
  %v886 = vmul.f32 %v726, %v870
  %v887 = vmul.f32 %v727, %v871
  %v888 = vmul.f32 %v728, %v872
  %v889 = vmul.f32 %v729, %v873
  %v890 = vmul.f32 %v730, %v874
  %v891 = vmul.f32 %v731, %v875
  %v892 = vmul.f32 %v732, %v876
  %v893 = vmul.f32 %v733, %v877
  %v894 = vmul.f32 %v734, %v878
  %v895 = vmul.f32 %v735, %v879
  %v896 = vmul.f32 %v736, %v880
  %v897 = vmul.f32 %v737, %v881
  %v898 = vmul.f32 %v738, %v882
  %v900 = vlaneseq
  %v901 = vshrl.u32 %v900, 7
  %v902 = vsub.s32 0, %v901
  %v903 = vrot.slane %v673, %v902
  %v905 = vmul.f32 %v883, %v903
  %v906 = vmul.f32 %v884, %v903
  %v907 = vmul.f32 %v885, %v903
  %v908 = vmul.f32 %v886, %v903
  %v909 = vmul.f32 %v887, %v903
  %v910 = vmul.f32 %v888, %v903
  %v911 = vmul.f32 %v889, %v903
  %v912 = vmul.f32 %v890, %v903
  %v913 = vmul.f32 %v891, %v903
  %v914 = vmul.f32 %v892, %v903
  %v915 = vmul.f32 %v893, %v903
  %v916 = vmul.f32 %v894, %v903
  %v917 = vmul.f32 %v895, %v903
  %v918 = vmul.f32 %v896, %v903
  %v919 = vmul.f32 %v897, %v903
  %v920 = vmul.f32 %v898, %v903
  %v922 = vlaneseq
  %v923 = vshrl.u32 %v922, 7
  %v924 = vsub.s32 0, %v923
  %v925 = vrot.slane %v674, %v924
  %v927 = vadd.f32 %v905, %v925
  %v928 = vadd.f32 %v906, %v925
  %v929 = vadd.f32 %v907, %v925
  %v930 = vadd.f32 %v908, %v925
  %v931 = vadd.f32 %v909, %v925
  %v932 = vadd.f32 %v910, %v925
  %v933 = vadd.f32 %v911, %v925
  %v934 = vadd.f32 %v912, %v925
  %v935 = vadd.f32 %v913, %v925
  %v936 = vadd.f32 %v914, %v925
  %v937 = vadd.f32 %v915, %v925
  %v938 = vadd.f32 %v916, %v925
  %v939 = vadd.f32 %v917, %v925
  %v940 = vadd.f32 %v918, %v925
  %v941 = vadd.f32 %v919, %v925
  %v942 = vadd.f32 %v920, %v925
  %v943 = vld [vmem:[%s1] sm:$0xff]
  %v944 = vld [vmem:[%s1 + $0x8] sm:$0xff]
  %v945 = vld [vmem:[%s1 + $0x10] sm:$0xff]
  %v946 = vld [vmem:[%s1 + $0x18] sm:$0xff]
  %v947 = vld [vmem:[%s1 + $0x20] sm:$0xff]
  %v948 = vld [vmem:[%s1 + $0x28] sm:$0xff]
  %v949 = vld [vmem:[%s1 + $0x30] sm:$0xff]
  %v950 = vld [vmem:[%s1 + $0x38] sm:$0xff]
  %v951 = vld [vmem:[%s1 + $0x40] sm:$0xff]
  %v952 = vld [vmem:[%s1 + $0x48] sm:$0xff]
  %v953 = vld [vmem:[%s1 + $0x50] sm:$0xff]
  %v954 = vld [vmem:[%s1 + $0x58] sm:$0xff]
  %v955 = vld [vmem:[%s1 + $0x60] sm:$0xff]
  %v956 = vld [vmem:[%s1 + $0x68] sm:$0xff]
  %v957 = vld [vmem:[%s1 + $0x70] sm:$0xff]
  %v958 = vld [vmem:[%s1 + $0x78] sm:$0xff]
  %v959 = vpack.c.bf16 %v944, %v943
  %v960 = vpack.c.bf16 %v946, %v945
  %v961 = vpack.c.bf16 %v948, %v947
  %v962 = vpack.c.bf16 %v950, %v949
  %v963 = vpack.c.bf16 %v952, %v951
  %v964 = vpack.c.bf16 %v954, %v953
  %v965 = vpack.c.bf16 %v956, %v955
  %v966 = vpack.c.bf16 %v958, %v957
  %v967 = vld [vmem:[%s10] sm:$0xf]
  %v968 = vld [vmem:[%s11] sm:$0x1]
  %v970 = vlaneseq
  %v971 = vshrl.u32 %v970, 7
  %v972 = vsub.s32 0, %v971
  %v973 = vrot.slane %v968, %v972
  %vm975 = vcmask 64512
  %v977 = vsel %vm975, %v959, 0
  %v980 = vsel %vm975, %v960, 0
  %v983 = vsel %vm975, %v961, 0
  %v986 = vsel %vm975, %v962, 0
  %v989 = vsel %vm975, %v963, 0
  %v992 = vsel %vm975, %v964, 0
  %v995 = vsel %vm975, %v965, 0
  %v998 = vsel %vm975, %v966, 0
  %vm1000 = vcmask 1043456
  %v1002 = vsel %vm1000, %v967, 0
  %1004 = vmatprep.subr.bf16.mxu0 0
  %1005 = vmatpush1.bf16.msra.mxu0 0
  %1006 = vmatprep.subr.bf16.mxu0 0
  %1007 = vmatpush1.bf16.msra.mxu0 0
  %1008 = vmatprep.subr.bf16.mxu0 0
  %1009 = vmatpush1.bf16.msra.mxu0 0
  %1010 = vmatprep.subr.bf16.mxu0 0
  %1011 = vmatpush1.bf16.msra.mxu0 0
  %1012 = vmatprep.subr.bf16.mxu0 0
  %1013 = vmatpush1.bf16.msra.mxu0 0
  %1014 = vmatprep.subr.bf16.mxu0 0
  %1015 = vmatpush1.bf16.msra.mxu0 0
  %1016 = vmatprep.subr.bf16.mxu0 0
  %1017 = vmatpush1.bf16.msra.mxu0 0
  %1018 = vmatprep.subr.bf16.mxu0 0
  %1019 = vmatpush1.bf16.msra.mxu0 %v1002
  %1020 = vmatprep.subr.bf16.mxu0 0
  %1021 = vmatpush2.bf16.msra.mxu0 0
  %1022 = vmatprep.subr.bf16.mxu0 0
  %1023 = vmatpush2.bf16.msra.mxu0 0
  %1024 = vmatprep.subr.bf16.mxu0 0
  %1025 = vmatpush2.bf16.msra.mxu0 0
  %1026 = vmatprep.subr.bf16.mxu0 0
  %1027 = vmatpush2.bf16.msra.mxu0 0
  %1028 = vmatprep.subr.bf16.mxu0 0
  %1029 = vmatpush2.bf16.msra.mxu0 0
  %1030 = vmatprep.subr.bf16.mxu0 0
  %1031 = vmatpush2.bf16.msra.mxu0 0
  %1032 = vmatprep.subr.bf16.mxu0 0
  %1033 = vmatpush2.bf16.msra.mxu0 0
  %1034 = vmatprep.subr.bf16.mxu0 0
  %1035 = vmatpush2.bf16.msra.mxu0 0
  %1036 = vmatprep.mubr.bf16.mxu0 0
  %1037 = vmatmul.mubr.bf16.gmra.mxu0 %v977
  %v1038 = vpop.f32.mrf.mxu0
  %v1039 = vadd.f32 %v973, %v1038
  %v1040 = vpop.f32.mrf.mxu0
  %v1041 = vpop.f32.mrf.mxu0
  %v1042 = vadd.f32 %v973, %v1041
  %v1043 = vpop.f32.mrf.mxu0
  %1044 = vmatprep.mubr.bf16.mxu0 0
  %1045 = vmatmul.mubr.bf16.gmra.mxu0 %v980
  %v1046 = vpop.f32.mrf.mxu0
  %v1047 = vadd.f32 %v973, %v1046
  %v1048 = vpop.f32.mrf.mxu0
  %v1049 = vpop.f32.mrf.mxu0
  %v1050 = vadd.f32 %v973, %v1049
  %v1051 = vpop.f32.mrf.mxu0
  %1052 = vmatprep.mubr.bf16.mxu0 0
  %1053 = vmatmul.mubr.bf16.gmra.mxu0 %v983
  %v1054 = vpop.f32.mrf.mxu0
  %v1055 = vadd.f32 %v973, %v1054
  %v1056 = vpop.f32.mrf.mxu0
  %v1057 = vpop.f32.mrf.mxu0
  %v1058 = vadd.f32 %v973, %v1057
  %v1059 = vpop.f32.mrf.mxu0
  %1060 = vmatprep.mubr.bf16.mxu0 0
  %1061 = vmatmul.mubr.bf16.gmra.mxu0 %v986
  %v1062 = vpop.f32.mrf.mxu0
  %v1063 = vadd.f32 %v973, %v1062
  %v1064 = vpop.f32.mrf.mxu0
  %v1065 = vpop.f32.mrf.mxu0
  %v1066 = vadd.f32 %v973, %v1065
  %v1067 = vpop.f32.mrf.mxu0
  %1068 = vmatprep.mubr.bf16.mxu0 0
  %1069 = vmatmul.mubr.bf16.gmra.mxu0 %v989
  %v1070 = vpop.f32.mrf.mxu0
  %v1071 = vadd.f32 %v973, %v1070
  %v1072 = vpop.f32.mrf.mxu0
  %v1073 = vpop.f32.mrf.mxu0
  %v1074 = vadd.f32 %v973, %v1073
  %v1075 = vpop.f32.mrf.mxu0
  %1076 = vmatprep.mubr.bf16.mxu0 0
  %1077 = vmatmul.mubr.bf16.gmra.mxu0 %v992
  %v1078 = vpop.f32.mrf.mxu0
  %v1079 = vadd.f32 %v973, %v1078
  %v1080 = vpop.f32.mrf.mxu0
  %v1081 = vpop.f32.mrf.mxu0
  %v1082 = vadd.f32 %v973, %v1081
  %v1083 = vpop.f32.mrf.mxu0
  %1084 = vmatprep.mubr.bf16.mxu0 0
  %1085 = vmatmul.mubr.bf16.gmra.mxu0 %v995
  %v1086 = vpop.f32.mrf.mxu0
  %v1087 = vadd.f32 %v973, %v1086
  %v1088 = vpop.f32.mrf.mxu0
  %v1089 = vpop.f32.mrf.mxu0
  %v1090 = vadd.f32 %v973, %v1089
  %v1091 = vpop.f32.mrf.mxu0
  %1092 = vmatprep.mubr.bf16.mxu0 0
  %1093 = vmatmul.mubr.bf16.gmra.mxu0 %v998
  %v1094 = vpop.f32.mrf.mxu0
  %v1095 = vadd.f32 %v973, %v1094
  %v1096 = vpop.f32.mrf.mxu0
  %v1097 = vpop.f32.mrf.mxu0
  %v1098 = vadd.f32 %v973, %v1097
  %v1099 = vpop.f32.mrf.mxu0
  %1100 = vdwg.mxu0
  %v1101 = vadd.f32 %v927, %v1039
  %v1102 = vadd.f32 %v928, %v1042
  %v1103 = vadd.f32 %v929, %v1047
  %v1104 = vadd.f32 %v930, %v1050
  %v1105 = vadd.f32 %v931, %v1055
  %v1106 = vadd.f32 %v932, %v1058
  %v1107 = vadd.f32 %v933, %v1063
  %v1108 = vadd.f32 %v934, %v1066
  %v1109 = vadd.f32 %v935, %v1071
  %v1110 = vadd.f32 %v936, %v1074
  %v1111 = vadd.f32 %v937, %v1079
  %v1112 = vadd.f32 %v938, %v1082
  %v1113 = vadd.f32 %v939, %v1087
  %v1114 = vadd.f32 %v940, %v1090
  %v1115 = vadd.f32 %v941, %v1095
  %v1116 = vadd.f32 %v942, %v1098
  %v1117 = vmax.f32 %v1101, 0.0
  %v1118 = vmax.f32 %v1102, 0.0
  %v1119 = vmax.f32 %v1103, 0.0
  %v1120 = vmax.f32 %v1104, 0.0
  %v1121 = vmax.f32 %v1105, 0.0
  %v1122 = vmax.f32 %v1106, 0.0
  %v1123 = vmax.f32 %v1107, 0.0
  %v1124 = vmax.f32 %v1108, 0.0
  %v1125 = vmax.f32 %v1109, 0.0
  %v1126 = vmax.f32 %v1110, 0.0
  %v1127 = vmax.f32 %v1111, 0.0
  %v1128 = vmax.f32 %v1112, 0.0
  %v1129 = vmax.f32 %v1113, 0.0
  %v1130 = vmax.f32 %v1114, 0.0
  %v1131 = vmax.f32 %v1115, 0.0
  %v1132 = vmax.f32 %v1116, 0.0
  %v1133 = vpack.c.bf16 %v1118, %v1117
  %v1134 = vpack.c.bf16 %v1120, %v1119
  %v1135 = vpack.c.bf16 %v1122, %v1121
  %v1136 = vpack.c.bf16 %v1124, %v1123
  %v1137 = vpack.c.bf16 %v1126, %v1125
  %v1138 = vpack.c.bf16 %v1128, %v1127
  %v1139 = vpack.c.bf16 %v1130, %v1129
  %v1140 = vpack.c.bf16 %v1132, %v1131
  %v1141 = vld [vmem:[%s12] sm:$0xf]
  %v1142 = vld [vmem:[%s12 + $0x4] sm:$0xf]
  %v1143 = vld [vmem:[%s12 + $0x8] sm:$0xf]
  %v1144 = vld [vmem:[%s12 + $0xc] sm:$0xf]
  %v1145 = vld [vmem:[%s12 + $0x10] sm:$0xf]
  %v1146 = vld [vmem:[%s12 + $0x14] sm:$0xf]
  %v1147 = vld [vmem:[%s12 + $0x18] sm:$0xf]
  %v1148 = vld [vmem:[%s12 + $0x1c] sm:$0xf]
  %v1149 = vld [vmem:[%s12 + $0x20] sm:$0xf]
  %v1150 = vld [vmem:[%s12 + $0x24] sm:$0xf]
  %v1151 = vld [vmem:[%s12 + $0x28] sm:$0xf]
  %v1152 = vld [vmem:[%s12 + $0x2c] sm:$0xf]
  %v1153 = vld [vmem:[%s12 + $0x30] sm:$0xf]
  %v1154 = vld [vmem:[%s12 + $0x34] sm:$0xf]
  %v1155 = vld [vmem:[%s12 + $0x38] sm:$0xf]
  %v1156 = vld [vmem:[%s12 + $0x3c] sm:$0xf]
  %v1157 = vld [vmem:[#allocation2] sm:$0x1]
  %v1159 = vlaneseq
  %v1160 = vshrl.u32 %v1159, 7
  %v1161 = vsub.s32 0, %v1160
  %v1162 = vrot.slane %v1157, %v1161
  %v1180 = vunpack.c.l.b16 %v1141
  %v1181 = vunpack.c.l.b16 %v1142
  %v1182 = vunpack.c.l.b16 %v1143
  %v1183 = vunpack.c.l.b16 %v1144
  %v1184 = vunpack.c.l.b16 %v1145
  %v1185 = vunpack.c.l.b16 %v1146
  %v1186 = vunpack.c.l.b16 %v1147
  %v1187 = vunpack.c.l.b16 %v1148
  %v1188 = vunpack.c.l.b16 %v1149
  %v1189 = vunpack.c.l.b16 %v1150
  %v1190 = vunpack.c.l.b16 %v1151
  %v1191 = vunpack.c.l.b16 %v1152
  %v1192 = vunpack.c.l.b16 %v1153
  %v1193 = vunpack.c.l.b16 %v1154
  %v1194 = vunpack.c.l.b16 %v1155
  %v1195 = vunpack.c.l.b16 %v1156
  %v1196 = vpack.c.b16 %v1181, %v1180
  %v1197 = vpack.c.b16 %v1183, %v1182
  %v1198 = vpack.c.b16 %v1185, %v1184
  %v1199 = vpack.c.b16 %v1187, %v1186
  %v1200 = vpack.c.b16 %v1189, %v1188
  %v1201 = vpack.c.b16 %v1191, %v1190
  %v1202 = vpack.c.b16 %v1193, %v1192
  %v1203 = vpack.c.b16 %v1195, %v1194
  %1212 = vmatprep.subr.bf16.mxu0 0
  %1213 = vmatpush1.bf16.msra.mxu0 %v1203
  %1214 = vmatprep.subr.bf16.mxu0 0
  %1215 = vmatpush1.bf16.msra.mxu0 %v1202
  %1216 = vmatprep.subr.bf16.mxu0 0
  %1217 = vmatpush1.bf16.msra.mxu0 %v1201
  %1218 = vmatprep.subr.bf16.mxu0 0
  %1219 = vmatpush1.bf16.msra.mxu0 %v1200
  %1220 = vmatprep.subr.bf16.mxu0 0
  %1221 = vmatpush1.bf16.msra.mxu0 %v1199
  %1222 = vmatprep.subr.bf16.mxu0 0
  %1223 = vmatpush1.bf16.msra.mxu0 %v1198
  %1224 = vmatprep.subr.bf16.mxu0 0
  %1225 = vmatpush1.bf16.msra.mxu0 %v1197
  %1226 = vmatprep.subr.bf16.mxu0 0
  %1227 = vmatpush1.bf16.msra.mxu0 %v1196
  %1228 = vmatprep.subr.bf16.mxu0 0
  %1229 = vmatpush2.bf16.msra.mxu0 0
  %1230 = vmatprep.subr.bf16.mxu0 0
  %1231 = vmatpush2.bf16.msra.mxu0 0
  %1232 = vmatprep.subr.bf16.mxu0 0
  %1233 = vmatpush2.bf16.msra.mxu0 0
  %1234 = vmatprep.subr.bf16.mxu0 0
  %1235 = vmatpush2.bf16.msra.mxu0 0
  %1236 = vmatprep.subr.bf16.mxu0 0
  %1237 = vmatpush2.bf16.msra.mxu0 0
  %1238 = vmatprep.subr.bf16.mxu0 0
  %1239 = vmatpush2.bf16.msra.mxu0 0
  %1240 = vmatprep.subr.bf16.mxu0 0
  %1241 = vmatpush2.bf16.msra.mxu0 0
  %1242 = vmatprep.subr.bf16.mxu0 0
  %1243 = vmatpush2.bf16.msra.mxu0 0
  %1244 = vmatprep.mubr.bf16.mxu0 0
  %1245 = vmatmul.mubr.bf16.gmra.mxu0 %v1133
  %v1246 = vpop.f32.mrf.mxu0
  %v1247 = vadd.f32 %v1162, %v1246
  %v1248 = vpop.f32.mrf.mxu0
  %v1249 = vpop.f32.mrf.mxu0
  %v1250 = vadd.f32 %v1162, %v1249
  %v1251 = vpop.f32.mrf.mxu0
  %1252 = vmatprep.mubr.bf16.mxu0 0
  %1253 = vmatmul.mubr.bf16.gmra.mxu0 %v1134
  %v1254 = vpop.f32.mrf.mxu0
  %v1255 = vadd.f32 %v1162, %v1254
  %v1256 = vpop.f32.mrf.mxu0
  %v1257 = vpop.f32.mrf.mxu0
  %v1258 = vadd.f32 %v1162, %v1257
  %v1259 = vpop.f32.mrf.mxu0
  %1260 = vmatprep.mubr.bf16.mxu0 0
  %1261 = vmatmul.mubr.bf16.gmra.mxu0 %v1135
  %v1262 = vpop.f32.mrf.mxu0
  %v1263 = vadd.f32 %v1162, %v1262
  %v1264 = vpop.f32.mrf.mxu0
  %v1265 = vpop.f32.mrf.mxu0
  %v1266 = vadd.f32 %v1162, %v1265
  %v1267 = vpop.f32.mrf.mxu0
  %1268 = vmatprep.mubr.bf16.mxu0 0
  %1269 = vmatmul.mubr.bf16.gmra.mxu0 %v1136
  %v1270 = vpop.f32.mrf.mxu0
  %v1271 = vadd.f32 %v1162, %v1270
  %v1272 = vpop.f32.mrf.mxu0
  %v1273 = vpop.f32.mrf.mxu0
  %v1274 = vadd.f32 %v1162, %v1273
  %v1275 = vpop.f32.mrf.mxu0
  %1276 = vmatprep.mubr.bf16.mxu0 0
  %1277 = vmatmul.mubr.bf16.gmra.mxu0 %v1137
  %v1278 = vpop.f32.mrf.mxu0
  %v1279 = vadd.f32 %v1162, %v1278
  %v1280 = vpop.f32.mrf.mxu0
  %v1281 = vpop.f32.mrf.mxu0
  %v1282 = vadd.f32 %v1162, %v1281
  %v1283 = vpop.f32.mrf.mxu0
  %1284 = vmatprep.mubr.bf16.mxu0 0
  %1285 = vmatmul.mubr.bf16.gmra.mxu0 %v1138
  %v1286 = vpop.f32.mrf.mxu0
  %v1287 = vadd.f32 %v1162, %v1286
  %v1288 = vpop.f32.mrf.mxu0
  %v1289 = vpop.f32.mrf.mxu0
  %v1290 = vadd.f32 %v1162, %v1289
  %v1291 = vpop.f32.mrf.mxu0
  %1292 = vmatprep.mubr.bf16.mxu0 0
  %1293 = vmatmul.mubr.bf16.gmra.mxu0 %v1139
  %v1294 = vpop.f32.mrf.mxu0
  %v1295 = vadd.f32 %v1162, %v1294
  %v1296 = vpop.f32.mrf.mxu0
  %v1297 = vpop.f32.mrf.mxu0
  %v1298 = vadd.f32 %v1162, %v1297
  %v1299 = vpop.f32.mrf.mxu0
  %1300 = vmatprep.mubr.bf16.mxu0 0
  %1301 = vmatmul.mubr.bf16.gmra.mxu0 %v1140
  %v1302 = vpop.f32.mrf.mxu0
  %v1303 = vadd.f32 %v1162, %v1302
  %v1304 = vpop.f32.mrf.mxu0
  %v1305 = vpop.f32.mrf.mxu0
  %v1306 = vadd.f32 %v1162, %v1305
  %v1307 = vpop.f32.mrf.mxu0
  %1308 = vdwg.mxu0
  %vm1309 = vcmask 7168
  %1310 = vst.msk [vmem:[%s14] sm:$0xff] %vm1309, %v1247
  %1311 = vst.msk [vmem:[%s14 + $0x8] sm:$0xff] %vm1309, %v1250
  %1312 = vst.msk [vmem:[%s14 + $0x10] sm:$0xff] %vm1309, %v1255
  %1313 = vst.msk [vmem:[%s14 + $0x18] sm:$0xff] %vm1309, %v1258
  %1314 = vst.msk [vmem:[%s14 + $0x20] sm:$0xff] %vm1309, %v1263
  %1315 = vst.msk [vmem:[%s14 + $0x28] sm:$0xff] %vm1309, %v1266
  %1316 = vst.msk [vmem:[%s14 + $0x30] sm:$0xff] %vm1309, %v1271
  %1317 = vst.msk [vmem:[%s14 + $0x38] sm:$0xff] %vm1309, %v1274
  %1318 = vst.msk [vmem:[%s14 + $0x40] sm:$0xff] %vm1309, %v1279
  %1319 = vst.msk [vmem:[%s14 + $0x48] sm:$0xff] %vm1309, %v1282
  %1320 = vst.msk [vmem:[%s14 + $0x50] sm:$0xff] %vm1309, %v1287
  %1321 = vst.msk [vmem:[%s14 + $0x58] sm:$0xff] %vm1309, %v1290
  %1322 = vst.msk [vmem:[%s14 + $0x60] sm:$0xff] %vm1309, %v1295
  %1323 = vst.msk [vmem:[%s14 + $0x68] sm:$0xff] %vm1309, %v1298
  %1324 = vst.msk [vmem:[%s14 + $0x70] sm:$0xff] %vm1309, %v1303
  %1325 = vst.msk [vmem:[%s14 + $0x78] sm:$0xff] %vm1309, %v1306
  // Predicated region
  $region58: #{tpu_custom_call.1} parent=0 // pred_check
    _
  $region59: #{tpu_custom_call.1} parent=0 // pred_check_branch
    %1327 = sbr.rel (0) target = $region61
  $region60: #{tpu_custom_call.1} parent=0 // pred_region
    _
  $region61: #{tpu_custom_call.1} parent=0 // pred_fallthru
    _
  // Predicated region
  $region62: #{tpu_custom_call.1} parent=0 // pred_check
    _
  $region63: #{tpu_custom_call.1} parent=0 // pred_check_branch
    %1329 = sbr.rel (0) target = $region65
  $region64: #{tpu_custom_call.1} parent=0 // pred_region
    _
  $region65: #{tpu_custom_call.1} parent=0 // pred_fallthru
    _

</llo_original>
